<compile_context>
chip_gen: v6e
topology: v6e:2x2x1
jax: 0.10.0
libtpu: 0.0.40
codegen_flags: <defaults>
</compile_context>

<pallas_src>
import jax
import jax.numpy as jnp
import numpy as np
from jax.experimental import pallas as pl
from jax.experimental.pallas import tpu as pltpu

HIDDEN = 400
LANE = 128
SUBLANE = 8
DEFAULT_TILE_M = 512


def _round_up(n, m):
    return ((n + m - 1) // m) * m


def _pad_to(a, shape):
    pads = [(0, s - d) for d, s in zip(a.shape, shape)]
    return jnp.pad(a, pads)


def _pick_tile_m(B, cap=DEFAULT_TILE_M):
    """Batch tile: minimize zero-row padding; prefer >=2 grid steps (v7x megacore)."""
    B8 = _round_up(B, SUBLANE)
    cands = {t for t in (128, 256, 512) if t <= cap}
    cands.add(min(B8, cap))
    half = _round_up((B8 + 1) // 2, SUBLANE)
    if SUBLANE <= half <= cap:
        cands.add(half)
    cands = sorted(cands)

    def waste(t):
        return _round_up(B8, t) - B

    t_best = min(cands, key=lambda t: (waste(t), -t))
    b_pad = _round_up(B8, t_best)
    if b_pad // t_best < 2:
        # Same batch padding, but >=2 grid steps so the 'parallel' axis can
        # actually shard across v7x's two TensorCores.
        for t in sorted(cands, reverse=True):
            if t < t_best and _round_up(B8, t) == b_pad and b_pad // t >= 2:
                t_best = t
                break
    return t_best


def vae_fwd_kernel(x_ref, eps_ref,
                   w1_ref, b1_ref, w2_ref, b2_ref,
                   w3_ref, b3_ref, w4_ref, b4_ref,
                   xprime_ref, z_ref, ml_ref):
    L_pad = eps_ref.shape[-1]

    # ---- encoder: Linear -> ReLU -> Linear ([mu | logvar] packed, N = 2*L_pad) ----
    # Matmul operands in bf16 (MXU-native); f32 accumulation; f32 elementwise.
    x = x_ref[...]
    h1 = jnp.dot(x.astype(jnp.bfloat16), w1_ref[...],
                 preferred_element_type=jnp.float32) + b1_ref[...]
    h1 = jnp.maximum(h1, 0.0)
    ml = jnp.dot(h1.astype(jnp.bfloat16), w2_ref[...],
                 preferred_element_type=jnp.float32) + b2_ref[...]
    mu = ml[:, :L_pad]        # clean 128-lane boundary slices: no cross-lane cost
    logvar = ml[:, L_pad:]

    # ---- reparameterization trick (f32; exp on EUP) ----
    z = jnp.exp(0.5 * logvar) * eps_ref[...] + mu

    # ---- decoder: Linear -> ReLU -> Linear -> Sigmoid ----
    h2 = jnp.dot(z.astype(jnp.bfloat16), w3_ref[...],
                 preferred_element_type=jnp.float32) + b3_ref[...]
    h2 = jnp.maximum(h2, 0.0)
    logits = jnp.dot(h2.astype(jnp.bfloat16), w4_ref[...],
                     preferred_element_type=jnp.float32) + b4_ref[...]

    xprime_ref[...] = jax.nn.sigmoid(logits)
    z_ref[...] = z
    ml_ref[...] = ml


def my_vae_forward(x, eps, params, *, tile_m=DEFAULT_TILE_M):
    """x: [B, D_in] f32, eps: [B, L] f32 (the torch.randn noise).

    Returns (x_prime, z, mu, logvar) exactly as MyVAE.forward (bf16 matmuls).
    """
    B, D_in = x.shape
    L = eps.shape[1]
    (w1, b1, w2, b2, w3, b3, w4, b4) = params

    # -------- lane-aligned padded sizes --------
    D_pad = _round_up(D_in, LANE)
    L_pad = _round_up(L, LANE)
    H_pad = _round_up(HIDDEN, LANE)

    TILE_M = _pick_tile_m(B, tile_m)
    B_pad = _round_up(B, TILE_M)

    bf16 = jnp.bfloat16

    # -------- pack w2/b2 as [mu-half | logvar-half], each half padded to L_pad ----
    w2_mu, w2_lv = w2[:, :L], w2[:, L:]
    b2_mu, b2_lv = b2[:, :L], b2[:, L:]
    w2_p = jnp.concatenate([_pad_to(w2_mu, (HIDDEN, L_pad)),
                            _pad_to(w2_lv, (HIDDEN, L_pad))], axis=1)
    w2_p = _pad_to(w2_p, (H_pad, 2 * L_pad)).astype(bf16)
    b2_p = jnp.concatenate([_pad_to(b2_mu, (1, L_pad)),
                            _pad_to(b2_lv, (1, L_pad))], axis=1)

    # -------- zero-pad everything to aligned shapes (weights -> bf16 once) ----
    x_p = _pad_to(x, (B_pad, D_pad))
    eps_p = _pad_to(eps, (B_pad, L_pad))
    w1_p = _pad_to(w1, (D_pad, H_pad)).astype(bf16); b1_p = _pad_to(b1, (1, H_pad))
    w3_p = _pad_to(w3, (L_pad, H_pad)).astype(bf16); b3_p = _pad_to(b3, (1, H_pad))
    w4_p = _pad_to(w4, (H_pad, D_pad)).astype(bf16); b4_p = _pad_to(b4, (1, D_pad))

    grid = (B_pad // TILE_M,)

    def act_spec(width):          # batch-tiled activation / output blocks
        return pl.BlockSpec((TILE_M, width), lambda i: (i, 0))

    def wt_spec(rows, cols):      # weights resident in VMEM across grid steps
        return pl.BlockSpec((rows, cols), lambda i: (0, 0))

    out_shapes = (
        jax.ShapeDtypeStruct((B_pad, D_pad), jnp.float32),      # x_prime
        jax.ShapeDtypeStruct((B_pad, L_pad), jnp.float32),      # z
        jax.ShapeDtypeStruct((B_pad, 2 * L_pad), jnp.float32),  # [mu | logvar]
    )

    xp_p, z_p, ml_p = pl.pallas_call(
        vae_fwd_kernel,
        out_shape=out_shapes,
        grid=grid,
        in_specs=[
            act_spec(D_pad), act_spec(L_pad),
            wt_spec(D_pad, H_pad), wt_spec(1, H_pad),
            wt_spec(H_pad, 2 * L_pad), wt_spec(1, 2 * L_pad),
            wt_spec(L_pad, H_pad), wt_spec(1, H_pad),
            wt_spec(H_pad, D_pad), wt_spec(1, D_pad),
        ],
        out_specs=(act_spec(D_pad), act_spec(L_pad), act_spec(2 * L_pad)),
        compiler_params=pltpu.CompilerParams(
            dimension_semantics=("parallel",),
            vmem_limit_bytes=32 << 20,
        ),
    )(x_p, eps_p, w1_p, b1_p, w2_p, b2_p, w3_p, b3_p, w4_p, b4_p)

    return (xp_p[:B, :D_in], z_p[:B, :L],
            ml_p[:B, :L], ml_p[:B, L_pad:L_pad + L])


# -------------------- parameter init (matches the PyTorch module) ------------
def xavier_uniform(key, fan_in, fan_out):
    # matches nn.init.xavier_uniform_ (gain=1); stored as [in, out]
    bound = float(np.sqrt(6.0 / (fan_in + fan_out)))
    return jax.random.uniform(key, (fan_in, fan_out), jnp.float32, -bound, bound)


def linear_bias(key, fan_in, fan_out):
    # PyTorch nn.Linear default bias init: U(-1/sqrt(fan_in), 1/sqrt(fan_in))
    bound = float(1.0 / np.sqrt(fan_in))
    return jax.random.uniform(key, (1, fan_out), jnp.float32, -bound, bound)


def init_params(key, input_dim, latent_dim):
    ks = jax.random.split(key, 8)
    w1 = xavier_uniform(ks[0], input_dim, HIDDEN)
    b1 = linear_bias(ks[1], input_dim, HIDDEN)
    w2 = xavier_uniform(ks[2], HIDDEN, 2 * latent_dim)
    b2 = linear_bias(ks[3], HIDDEN, 2 * latent_dim)
    w3 = xavier_uniform(ks[4], latent_dim, HIDDEN)
    b3 = linear_bias(ks[5], latent_dim, HIDDEN)
    w4 = xavier_uniform(ks[6], HIDDEN, input_dim)
    b4 = linear_bias(ks[7], HIDDEN, input_dim)
    return (w1, b1, w2, b2, w3, b3, w4, b4)


def reference_forward(x, eps, params):
    """Pure-JAX f32 reference for correctness checking."""
    (w1, b1, w2, b2, w3, b3, w4, b4) = params
    L = eps.shape[1]
    h1 = jnp.maximum(x @ w1 + b1, 0.0)
    ml = h1 @ w2 + b2
    mu, logvar = ml[:, :L], ml[:, L:]
    z = jnp.exp(0.5 * logvar) * eps + mu
    h2 = jnp.maximum(z @ w3 + b3, 0.0)
    x_prime = jax.nn.sigmoid(h2 @ w4 + b4)
    return x_prime, z, mu, logvar


if __name__ == "__main__":
    batch = 8
    input_dim = 64
    latent_dim = 16

    root = jax.random.PRNGKey(0)
    k_params, k_x, k_eps = jax.random.split(root, 3)

    params = init_params(k_params, input_dim, latent_dim)
    x = jax.random.uniform(k_x, (batch, input_dim), jnp.float32)      # data in [0,1]
    eps = jax.random.normal(k_eps, (batch, latent_dim), jnp.float32)  # reparam noise

    x_prime, z, mu, logvar = jax.block_until_ready(
        my_vae_forward(x, eps, params))

    # sanity check against pure-JAX f32 reference (bf16 matmuls -> relaxed tol)
    rx, rz, rmu, rlv = reference_forward(x, eps, params)
    np.testing.assert_allclose(np.asarray(x_prime), np.asarray(rx), rtol=2e-2, atol=2e-2)
    np.testing.assert_allclose(np.asarray(z), np.asarray(rz), rtol=2e-2, atol=2e-2)
    np.testing.assert_allclose(np.asarray(mu), np.asarray(rmu), rtol=2e-2, atol=2e-2)
    np.testing.assert_allclose(np.asarray(logvar), np.asarray(rlv), rtol=2e-2, atol=2e-2)

    assert x_prime.shape == (batch, input_dim)
    assert z.shape == mu.shape == logvar.shape == (batch, latent_dim)
    print("KERNEL_OK")
</pallas_src>

<mosaic_0001>
module attributes {stable_mosaic.version = 11 : i64} {
  func.func @vae_fwd_kernel(%arg0: i32, %arg1: memref<8x128xf32, #tpu.memory_space<vmem>>, %arg2: memref<8x128xf32, #tpu.memory_space<vmem>>, %arg3: memref<128x512xbf16, #tpu.memory_space<vmem>>, %arg4: memref<1x512xf32, #tpu.memory_space<vmem>>, %arg5: memref<512x256xbf16, #tpu.memory_space<vmem>>, %arg6: memref<1x256xf32, #tpu.memory_space<vmem>>, %arg7: memref<128x512xbf16, #tpu.memory_space<vmem>>, %arg8: memref<1x512xf32, #tpu.memory_space<vmem>>, %arg9: memref<512x128xbf16, #tpu.memory_space<vmem>>, %arg10: memref<1x128xf32, #tpu.memory_space<vmem>>, %arg11: memref<8x128xf32, #tpu.memory_space<vmem>>, %arg12: memref<8x128xf32, #tpu.memory_space<vmem>>, %arg13: memref<8x256xf32, #tpu.memory_space<vmem>>) attributes {dimension_semantics = [#tpu.dimension_semantics<parallel>], iteration_bounds = array<i64: 1>, scalar_prefetch = 0 : i64, scratch_operands = 0 : i64, tpu.core_type = #tpu.core_type<tc>, window_params = [{transform_indices = @transform_0, window_bounds = array<i64: 8, 128>}, {transform_indices = @transform_1, window_bounds = array<i64: 8, 128>}, {pipeline_mode = #tpu.pipeline_mode<synchronous>, transform_indices = @transform_2, window_bounds = array<i64: 128, 512>}, {pipeline_mode = #tpu.pipeline_mode<synchronous>, transform_indices = @transform_3, window_bounds = array<i64: 1, 512>}, {pipeline_mode = #tpu.pipeline_mode<synchronous>, transform_indices = @transform_4, window_bounds = array<i64: 512, 256>}, {pipeline_mode = #tpu.pipeline_mode<synchronous>, transform_indices = @transform_5, window_bounds = array<i64: 1, 256>}, {pipeline_mode = #tpu.pipeline_mode<synchronous>, transform_indices = @transform_6, window_bounds = array<i64: 128, 512>}, {pipeline_mode = #tpu.pipeline_mode<synchronous>, transform_indices = @transform_7, window_bounds = array<i64: 1, 512>}, {pipeline_mode = #tpu.pipeline_mode<synchronous>, transform_indices = @transform_8, window_bounds = array<i64: 512, 128>}, {pipeline_mode = #tpu.pipeline_mode<synchronous>, transform_indices = @transform_9, window_bounds = array<i64: 1, 128>}, {transform_indices = @transform_10, window_bounds = array<i64: 8, 128>}, {transform_indices = @transform_11, window_bounds = array<i64: 8, 128>}, {transform_indices = @transform_12, window_bounds = array<i64: 8, 256>}]} {
    %c0 = arith.constant 0 : index
    %c0_0 = arith.constant 0 : index
    %0 = vector.load %arg1[%c0, %c0_0] : memref<8x128xf32, #tpu.memory_space<vmem>>, vector<8x128xf32>
    %1 = arith.truncf %0 : vector<8x128xf32> to vector<8x128xbf16>
    %c0_1 = arith.constant 0 : index
    %c0_2 = arith.constant 0 : index
    %2 = vector.load %arg3[%c0_1, %c0_2] : memref<128x512xbf16, #tpu.memory_space<vmem>>, vector<128x512xbf16>
    %cst = arith.constant dense<0.000000e+00> : vector<8x512xf32>
    %3 = tpu.matmul %1, %2, %cst {dimension_numbers = #tpu.dot_dimension_numbers<[1], [0], [0], [1], [0, 0, 1, 1], [], []>} : vector<8x128xbf16>, vector<128x512xbf16>, vector<8x512xf32> -> vector<8x512xf32>
    %c0_3 = arith.constant 0 : index
    %c0_4 = arith.constant 0 : index
    %4 = vector.load %arg4[%c0_3, %c0_4] : memref<1x512xf32, #tpu.memory_space<vmem>>, vector<1x512xf32>
    %5 = vector.broadcast %4 : vector<1x512xf32> to vector<8x512xf32>
    %6 = arith.addf %3, %5 : vector<8x512xf32>
    %cst_5 = arith.constant 0.000000e+00 : f32
    %7 = vector.broadcast %cst_5 : f32 to vector<8x512xf32>
    %8 = arith.maximumf %6, %7 : vector<8x512xf32>
    %9 = arith.truncf %8 : vector<8x512xf32> to vector<8x512xbf16>
    %c0_6 = arith.constant 0 : index
    %c0_7 = arith.constant 0 : index
    %10 = vector.load %arg5[%c0_6, %c0_7] : memref<512x256xbf16, #tpu.memory_space<vmem>>, vector<512x256xbf16>
    %cst_8 = arith.constant dense<0.000000e+00> : vector<8x256xf32>
    %11 = tpu.matmul %9, %10, %cst_8 {dimension_numbers = #tpu.dot_dimension_numbers<[1], [0], [0], [1], [0, 0, 1, 1], [], []>} : vector<8x512xbf16>, vector<512x256xbf16>, vector<8x256xf32> -> vector<8x256xf32>
    %c0_9 = arith.constant 0 : index
    %c0_10 = arith.constant 0 : index
    %12 = vector.load %arg6[%c0_9, %c0_10] : memref<1x256xf32, #tpu.memory_space<vmem>>, vector<1x256xf32>
    %13 = vector.broadcast %12 : vector<1x256xf32> to vector<8x256xf32>
    %14 = arith.addf %11, %13 : vector<8x256xf32>
    %15 = vector.extract_strided_slice %14 {offsets = [0, 0], sizes = [8, 128], strides = [1, 1]} : vector<8x256xf32> to vector<8x128xf32>
    %16 = vector.extract_strided_slice %14 {offsets = [0, 128], sizes = [8, 128], strides = [1, 1]} : vector<8x256xf32> to vector<8x128xf32>
    %cst_11 = arith.constant 5.000000e-01 : f32
    %17 = vector.broadcast %cst_11 : f32 to vector<8x128xf32>
    %18 = arith.mulf %17, %16 : vector<8x128xf32>
    %19 = math.exp %18 : vector<8x128xf32>
    %c0_12 = arith.constant 0 : index
    %c0_13 = arith.constant 0 : index
    %20 = vector.load %arg2[%c0_12, %c0_13] : memref<8x128xf32, #tpu.memory_space<vmem>>, vector<8x128xf32>
    %21 = arith.mulf %19, %20 : vector<8x128xf32>
    %22 = arith.addf %21, %15 : vector<8x128xf32>
    %23 = arith.truncf %22 : vector<8x128xf32> to vector<8x128xbf16>
    %c0_14 = arith.constant 0 : index
    %c0_15 = arith.constant 0 : index
    %24 = vector.load %arg7[%c0_14, %c0_15] : memref<128x512xbf16, #tpu.memory_space<vmem>>, vector<128x512xbf16>
    %cst_16 = arith.constant dense<0.000000e+00> : vector<8x512xf32>
    %25 = tpu.matmul %23, %24, %cst_16 {dimension_numbers = #tpu.dot_dimension_numbers<[1], [0], [0], [1], [0, 0, 1, 1], [], []>} : vector<8x128xbf16>, vector<128x512xbf16>, vector<8x512xf32> -> vector<8x512xf32>
    %c0_17 = arith.constant 0 : index
    %c0_18 = arith.constant 0 : index
    %26 = vector.load %arg8[%c0_17, %c0_18] : memref<1x512xf32, #tpu.memory_space<vmem>>, vector<1x512xf32>
    %27 = vector.broadcast %26 : vector<1x512xf32> to vector<8x512xf32>
    %28 = arith.addf %25, %27 : vector<8x512xf32>
    %cst_19 = arith.constant 0.000000e+00 : f32
    %29 = vector.broadcast %cst_19 : f32 to vector<8x512xf32>
    %30 = arith.maximumf %28, %29 : vector<8x512xf32>
    %31 = arith.truncf %30 : vector<8x512xf32> to vector<8x512xbf16>
    %c0_20 = arith.constant 0 : index
    %c0_21 = arith.constant 0 : index
    %32 = vector.load %arg9[%c0_20, %c0_21] : memref<512x128xbf16, #tpu.memory_space<vmem>>, vector<512x128xbf16>
    %cst_22 = arith.constant dense<0.000000e+00> : vector<8x128xf32>
    %33 = tpu.matmul %31, %32, %cst_22 {dimension_numbers = #tpu.dot_dimension_numbers<[1], [0], [0], [1], [0, 0, 1, 1], [], []>} : vector<8x512xbf16>, vector<512x128xbf16>, vector<8x128xf32> -> vector<8x128xf32>
    %c0_23 = arith.constant 0 : index
    %c0_24 = arith.constant 0 : index
    %34 = vector.load %arg10[%c0_23, %c0_24] : memref<1x128xf32, #tpu.memory_space<vmem>>, vector<1x128xf32>
    %35 = vector.broadcast %34 : vector<1x128xf32> to vector<8x128xf32>
    %36 = arith.addf %33, %35 : vector<8x128xf32>
    %37 = arith.negf %36 : vector<8x128xf32>
    %38 = math.exp %37 : vector<8x128xf32>
    %cst_25 = arith.constant 1.000000e+00 : f32
    %39 = vector.broadcast %cst_25 : f32 to vector<8x128xf32>
    %40 = arith.addf %39, %38 : vector<8x128xf32>
    %41 = arith.divf %39, %40 : vector<8x128xf32>
    %c0_26 = arith.constant 0 : index
    %c0_27 = arith.constant 0 : index
    %42 = vector.load %arg11[%c0_26, %c0_27] : memref<8x128xf32, #tpu.memory_space<vmem>>, vector<8x128xf32>
    tpu.vector_store %arg11[%c0_26, %c0_27], %41 {strides = array<i32>} : memref<8x128xf32, #tpu.memory_space<vmem>>, vector<8x128xf32>,
    %c0_28 = arith.constant 0 : index
    %c0_29 = arith.constant 0 : index
    %43 = vector.load %arg12[%c0_28, %c0_29] : memref<8x128xf32, #tpu.memory_space<vmem>>, vector<8x128xf32>
    tpu.vector_store %arg12[%c0_28, %c0_29], %22 {strides = array<i32>} : memref<8x128xf32, #tpu.memory_space<vmem>>, vector<8x128xf32>,
    %c0_30 = arith.constant 0 : index
    %c0_31 = arith.constant 0 : index
    %44 = vector.load %arg13[%c0_30, %c0_31] : memref<8x256xf32, #tpu.memory_space<vmem>>, vector<8x256xf32>
    tpu.vector_store %arg13[%c0_30, %c0_31], %14 {strides = array<i32>} : memref<8x256xf32, #tpu.memory_space<vmem>>, vector<8x256xf32>,
    return
  }
  func.func @transform_0(%arg0: i32) -> (i32, i32) {
    %c0_i32 = arith.constant 0 : i32
    %c0_i32_0 = arith.constant 0 : i32
    return %arg0, %c0_i32 : i32, i32
  }
  func.func @transform_1(%arg0: i32) -> (i32, i32) {
    %c0_i32 = arith.constant 0 : i32
    %c0_i32_0 = arith.constant 0 : i32
    return %arg0, %c0_i32 : i32, i32
  }
  func.func @transform_2(%arg0: i32) -> (i32, i32) {
    %c0_i32 = arith.constant 0 : i32
    %c0_i32_0 = arith.constant 0 : i32
    %c0_i32_1 = arith.constant 0 : i32
    return %c0_i32, %c0_i32_0 : i32, i32
  }
  func.func @transform_3(%arg0: i32) -> (i32, i32) {
    %c0_i32 = arith.constant 0 : i32
    %c0_i32_0 = arith.constant 0 : i32
    %c0_i32_1 = arith.constant 0 : i32
    return %c0_i32, %c0_i32_0 : i32, i32
  }
  func.func @transform_4(%arg0: i32) -> (i32, i32) {
    %c0_i32 = arith.constant 0 : i32
    %c0_i32_0 = arith.constant 0 : i32
    %c0_i32_1 = arith.constant 0 : i32
    return %c0_i32, %c0_i32_0 : i32, i32
  }
  func.func @transform_5(%arg0: i32) -> (i32, i32) {
    %c0_i32 = arith.constant 0 : i32
    %c0_i32_0 = arith.constant 0 : i32
    %c0_i32_1 = arith.constant 0 : i32
    return %c0_i32, %c0_i32_0 : i32, i32
  }
  func.func @transform_6(%arg0: i32) -> (i32, i32) {
    %c0_i32 = arith.constant 0 : i32
    %c0_i32_0 = arith.constant 0 : i32
    %c0_i32_1 = arith.constant 0 : i32
    return %c0_i32, %c0_i32_0 : i32, i32
  }
  func.func @transform_7(%arg0: i32) -> (i32, i32) {
    %c0_i32 = arith.constant 0 : i32
    %c0_i32_0 = arith.constant 0 : i32
    %c0_i32_1 = arith.constant 0 : i32
    return %c0_i32, %c0_i32_0 : i32, i32
  }
  func.func @transform_8(%arg0: i32) -> (i32, i32) {
    %c0_i32 = arith.constant 0 : i32
    %c0_i32_0 = arith.constant 0 : i32
    %c0_i32_1 = arith.constant 0 : i32
    return %c0_i32, %c0_i32_0 : i32, i32
  }
  func.func @transform_9(%arg0: i32) -> (i32, i32) {
    %c0_i32 = arith.constant 0 : i32
    %c0_i32_0 = arith.constant 0 : i32
    %c0_i32_1 = arith.constant 0 : i32
    return %c0_i32, %c0_i32_0 : i32, i32
  }
  func.func @transform_10(%arg0: i32) -> (i32, i32) {
    %c0_i32 = arith.constant 0 : i32
    %c0_i32_0 = arith.constant 0 : i32
    return %arg0, %c0_i32 : i32, i32
  }
  func.func @transform_11(%arg0: i32) -> (i32, i32) {
    %c0_i32 = arith.constant 0 : i32
    %c0_i32_0 = arith.constant 0 : i32
    return %arg0, %c0_i32 : i32, i32
  }
  func.func @transform_12(%arg0: i32) -> (i32, i32) {
    %c0_i32 = arith.constant 0 : i32
    %c0_i32_0 = arith.constant 0 : i32
    return %arg0, %c0_i32 : i32, i32
  }
}

</mosaic_0001>

<llo_original>
// kernel: tpu_custom_call.1
$region0: #{tpu_custom_call.1}
  #allocation0 [shape = 'u32[]', space=smem, size = 0x4, offset = 0x4, fixed_abs, tag = 'smem constant byte address 0x4 - core index']
  #allocation1 [shape = 'u32[144,128]{1,0:T(1,128)}', space=vmem, size = 0x12000, scoped, tag = 'internal scratch']
  %s0 = inlined_call_operand.hbm [shape: f32[8,128], index: 0, kind: input, shape index: {}]
  %s1 = inlined_call_operand.hbm [shape: f32[8,128], index: 1, kind: input, shape index: {}]
  %s2 = inlined_call_operand.hbm [shape: bf16[128,512], index: 2, kind: input, shape index: {}]
  %s3 = inlined_call_operand.vmem [shape: f32[1,512], index: 3, kind: input, shape index: {}]
  %s4 = inlined_call_operand.hbm [shape: bf16[512,256], index: 4, kind: input, shape index: {}]
  %s5 = inlined_call_operand.hbm [shape: f32[1,256], index: 5, kind: input, shape index: {}]
  %s6 = inlined_call_operand.hbm [shape: bf16[128,512], index: 6, kind: input, shape index: {}]
  %s7 = inlined_call_operand.vmem [shape: f32[1,512], index: 7, kind: input, shape index: {}]
  %s8 = inlined_call_operand.hbm [shape: bf16[512,128], index: 8, kind: input, shape index: {}]
  %s9 = inlined_call_operand.vmem [shape: f32[1,128], index: 9, kind: input, shape index: {}]
  %s10 = inlined_call_operand.hbm [shape: f32[8,128], index: 10, kind: output, shape index: {0}]
  %s11 = inlined_call_operand.hbm [shape: f32[8,128], index: 11, kind: output, shape index: {1}]
  %s12 = inlined_call_operand.hbm [shape: f32[8,256], index: 12, kind: output, shape index: {2}]
  %13 = xla_tuple %s10, %s11, %s12
  %s14 = sld [smem:[#allocation0]]
  $region94: #{tpu_custom_call.1} parent=0
    _
  %s16 = ssub.s32 1, %s14
  %s17 = scalar_select 0, %s16, %s14
  $region1: #{tpu_custom_call.1} parent=0
    #allocation2 [shape = 'u8[4096]{0}', space=vmem, size = 0x1000, scoped, tag = 'input window, operand 0, single buffered']
    #allocation3 [shape = 's32[1]{0}', space=sflag, size = 0x4, scoped, tag = 'scoped memory for tpu_custom_call.1']
    #allocation4 [shape = 's32[1]{0}', space=sflag, size = 0x4, scoped, tag = 'scoped memory for tpu_custom_call.1']
    #allocation5 [shape = 'u8[4096]{0}', space=vmem, size = 0x1000, scoped, tag = 'input window, operand 1, single buffered']
    #allocation6 [shape = 's32[1]{0}', space=sflag, size = 0x4, scoped, tag = 'scoped memory for tpu_custom_call.1']
    #allocation7 [shape = 'u8[131072]{0}', space=vmem, size = 0x20000, scoped, tag = 'input window, operand 2, single buffered']
    #allocation8 [shape = 'u8[262144]{0}', space=vmem, size = 0x40000, scoped, tag = 'input window, operand 4, single buffered']
    #allocation9 [shape = 's32[1]{0}', space=sflag, size = 0x4, scoped, tag = 'scoped memory for tpu_custom_call.1']
    #allocation10 [shape = 'u8[1024]{0}', space=vmem, size = 0x400, scoped, tag = 'input window, operand 5, single buffered']
    #allocation11 [shape = 'u8[131072]{0}', space=vmem, size = 0x20000, scoped, tag = 'input window, operand 6, single buffered']
    #allocation12 [shape = 's32[1]{0}', space=sflag, size = 0x4, scoped, tag = 'scoped memory for tpu_custom_call.1']
    #allocation13 [shape = 'u8[131072]{0}', space=vmem, size = 0x20000, scoped, tag = 'input window, operand 8, single buffered']
    #allocation14 [shape = 'u8[4096]{0}', space=vmem, size = 0x1000, scoped, tag = 'output window, operand 0, single buffered']
    #allocation15 [shape = 'u8[4096]{0}', space=vmem, size = 0x1000, scoped, tag = 'output window, operand 1, single buffered']
    #allocation16 [shape = 's32[1]{0}', space=sflag, size = 0x4, scoped, tag = 'scoped memory for tpu_custom_call.1']
    #allocation17 [shape = 'u8[8192]{0}', space=vmem, size = 0x2000, scoped, tag = 'output window, operand 2, single buffered']
    %18 = vsyncpa [#allocation3], 0
    %19 = vsyncpa [#allocation6], 0
    %20 = vsyncpa [#allocation9], 0
    %21 = vsyncpa [#allocation12], 0
    %22 = vsyncpa [#allocation4], 0
    %23 = vsyncpa [#allocation16], 0
    // Predicated region
    $region2: #{tpu_custom_call.1} parent=1 // pred_check
      _
    $region3: #{tpu_custom_call.1} parent=1 // pred_check_branch
      %25 = sbr.rel (0) target = $region5
    $region4: #{tpu_custom_call.1} parent=1 // pred_region
      %s27 = ssub.s32 128, 128
      %28 = vsyncadd [#allocation3], %s27
      %s30 = sshll.u32 [#allocation2], 4
      %s31 = int_to_ptr.vmem [resolvable:$true] %s30
      %33 = dma.hbm_to_vmem [thread:$0]  %s0, 128, %s31, [#allocation3]
    $region5: #{tpu_custom_call.1} parent=1 // pred_fallthru
      _
    // Predicated region
    $region6: #{tpu_custom_call.1} parent=1 // pred_check
      _
    $region7: #{tpu_custom_call.1} parent=1 // pred_check_branch
      %35 = sbr.rel (0) target = $region9
    $region8: #{tpu_custom_call.1} parent=1 // pred_region
      %s37 = ssub.s32 128, 128
      %38 = vsyncadd [#allocation6], %s37
      %s40 = sshll.u32 [#allocation5], 4
      %s41 = int_to_ptr.vmem [resolvable:$true] %s40
      %43 = dma.hbm_to_vmem [thread:$0]  %s1, 128, %s41, [#allocation6]
    $region9: #{tpu_custom_call.1} parent=1 // pred_fallthru
      _
    // Predicated region
    $region10: #{tpu_custom_call.1} parent=1 // pred_check
      _
    $region11: #{tpu_custom_call.1} parent=1 // pred_check_branch
      %45 = sbr.rel (0) target = $region13
    $region12: #{tpu_custom_call.1} parent=1 // pred_region
      %s47 = ssub.s32 4096, 4096
      %48 = vsyncadd [#allocation6], %s47
      %s49 = sshll.u32 [#allocation7], 4
      %s50 = int_to_ptr.vmem [resolvable:$true] %s49
      %55 = dma.hbm_to_vmem [thread:$0]  %s2, 4096, %s50, [#allocation6], 256, 256, 16
    $region13: #{tpu_custom_call.1} parent=1 // pred_fallthru
      _
    // Predicated region
    $region14: #{tpu_custom_call.1} parent=1 // pred_check
      _
    $region15: #{tpu_custom_call.1} parent=1 // pred_check_branch
      %57 = sbr.rel (0) target = $region17
    $region16: #{tpu_custom_call.1} parent=1 // pred_region
      _
    $region17: #{tpu_custom_call.1} parent=1 // pred_fallthru
      _
    // Predicated region
    $region18: #{tpu_custom_call.1} parent=1 // pred_check
      _
    $region19: #{tpu_custom_call.1} parent=1 // pred_check_branch
      %59 = sbr.rel (0) target = $region21
    $region20: #{tpu_custom_call.1} parent=1 // pred_region
      %s61 = ssub.s32 8192, 8192
      %62 = vsyncadd [#allocation9], %s61
      %s63 = sshll.u32 [#allocation8], 4
      %s64 = int_to_ptr.vmem [resolvable:$true] %s63
      %69 = dma.hbm_to_vmem [thread:$0]  %s4, 8192, %s64, [#allocation9], 128, 128, 8
    $region21: #{tpu_custom_call.1} parent=1 // pred_fallthru
      _
    // Predicated region
    $region22: #{tpu_custom_call.1} parent=1 // pred_check
      _
    $region23: #{tpu_custom_call.1} parent=1 // pred_check_branch
      %71 = sbr.rel (0) target = $region25
    $region24: #{tpu_custom_call.1} parent=1 // pred_region
      %s73 = ssub.s32 32, 32
      %74 = vsyncadd [#allocation9], %s73
      %s76 = sshll.u32 [#allocation10], 4
      %s77 = int_to_ptr.vmem [resolvable:$true] %s76
      %79 = dma.hbm_to_vmem [thread:$0]  %s5, 32, %s77, [#allocation9]
    $region25: #{tpu_custom_call.1} parent=1 // pred_fallthru
      _
    // Predicated region
    $region26: #{tpu_custom_call.1} parent=1 // pred_check
      _
    $region27: #{tpu_custom_call.1} parent=1 // pred_check_branch
      %81 = sbr.rel (0) target = $region29
    $region28: #{tpu_custom_call.1} parent=1 // pred_region
      %s83 = ssub.s32 4096, 4096
      %84 = vsyncadd [#allocation12], %s83
      %s85 = sshll.u32 [#allocation11], 4
      %s86 = int_to_ptr.vmem [resolvable:$true] %s85
      %91 = dma.hbm_to_vmem [thread:$0]  %s6, 4096, %s86, [#allocation12], 256, 256, 16
    $region29: #{tpu_custom_call.1} parent=1 // pred_fallthru
      _
    // Predicated region
    $region30: #{tpu_custom_call.1} parent=1 // pred_check
      _
    $region31: #{tpu_custom_call.1} parent=1 // pred_check_branch
      %93 = sbr.rel (0) target = $region33
    $region32: #{tpu_custom_call.1} parent=1 // pred_region
      _
    $region33: #{tpu_custom_call.1} parent=1 // pred_fallthru
      _
    // Predicated region
    $region34: #{tpu_custom_call.1} parent=1 // pred_check
      _
    $region35: #{tpu_custom_call.1} parent=1 // pred_check_branch
      %95 = sbr.rel (0) target = $region37
    $region36: #{tpu_custom_call.1} parent=1 // pred_region
      %s97 = ssub.s32 4096, 4096
      %98 = vsyncadd [#allocation12], %s97
      %s99 = sshll.u32 [#allocation13], 4
      %s100 = int_to_ptr.vmem [resolvable:$true] %s99
      %105 = dma.hbm_to_vmem [thread:$0]  %s8, 4096, %s100, [#allocation12], 64, 64, 4
    $region37: #{tpu_custom_call.1} parent=1 // pred_fallthru
      _
    // Predicated region
    $region38: #{tpu_custom_call.1} parent=1 // pred_check
      _
    $region39: #{tpu_custom_call.1} parent=1 // pred_check_branch
      %107 = sbr.rel (0) target = $region41
    $region40: #{tpu_custom_call.1} parent=1 // pred_region
      _
    $region41: #{tpu_custom_call.1} parent=1 // pred_fallthru
      _
    // Predicated region
    $region42: #{tpu_custom_call.1} parent=1 // pred_check
      _
    $region43: #{tpu_custom_call.1} parent=1 // pred_check_branch
      %109 = sbr.rel (0) target = $region45
    $region44: #{tpu_custom_call.1} parent=1 // pred_region
      %110 = dma.done [#allocation3], 128
    $region45: #{tpu_custom_call.1} parent=1 // pred_fallthru
      _
    // Predicated region
    $region46: #{tpu_custom_call.1} parent=1 // pred_check
      _
    $region47: #{tpu_custom_call.1} parent=1 // pred_check_branch
      %112 = sbr.rel (0) target = $region49
    $region48: #{tpu_custom_call.1} parent=1 // pred_region
      %113 = dma.done [#allocation6], 128
    $region49: #{tpu_custom_call.1} parent=1 // pred_fallthru
      _
    // Predicated region
    $region50: #{tpu_custom_call.1} parent=1 // pred_check
      _
    $region51: #{tpu_custom_call.1} parent=1 // pred_check_branch
      %115 = sbr.rel (0) target = $region53
    $region52: #{tpu_custom_call.1} parent=1 // pred_region
      %116 = dma.done [#allocation6], 4096
    $region53: #{tpu_custom_call.1} parent=1 // pred_fallthru
      _
    // Predicated region
    $region54: #{tpu_custom_call.1} parent=1 // pred_check
      _
    $region55: #{tpu_custom_call.1} parent=1 // pred_check_branch
      %118 = sbr.rel (0) target = $region57
    $region56: #{tpu_custom_call.1} parent=1 // pred_region
      %119 = dma.done [#allocation9], 8192
    $region57: #{tpu_custom_call.1} parent=1 // pred_fallthru
      _
    // Predicated region
    $region58: #{tpu_custom_call.1} parent=1 // pred_check
      _
    $region59: #{tpu_custom_call.1} parent=1 // pred_check_branch
      %121 = sbr.rel (0) target = $region61
    $region60: #{tpu_custom_call.1} parent=1 // pred_region
      %122 = dma.done [#allocation9], 32
    $region61: #{tpu_custom_call.1} parent=1 // pred_fallthru
      _
    // Predicated region
    $region62: #{tpu_custom_call.1} parent=1 // pred_check
      _
    $region63: #{tpu_custom_call.1} parent=1 // pred_check_branch
      %124 = sbr.rel (0) target = $region65
    $region64: #{tpu_custom_call.1} parent=1 // pred_region
      %125 = dma.done [#allocation12], 4096
    $region65: #{tpu_custom_call.1} parent=1 // pred_fallthru
      _
    // Predicated region
    $region66: #{tpu_custom_call.1} parent=1 // pred_check
      _
    $region67: #{tpu_custom_call.1} parent=1 // pred_check_branch
      %127 = sbr.rel (0) target = $region69
    $region68: #{tpu_custom_call.1} parent=1 // pred_region
      %128 = dma.done [#allocation12], 4096
    $region69: #{tpu_custom_call.1} parent=1 // pred_fallthru
      _
    %v130 = vld [vmem:[#allocation2] sm:$0xff]
    %v131 = vpack.c.bf16 %v130, %v130
    %v132 = vld [vmem:[#allocation7] sm:$0xff]
    %v133 = vld [vmem:[#allocation7 + $0x8] sm:$0xff]
    %v134 = vld [vmem:[#allocation7 + $0x10] sm:$0xff]
    %v135 = vld [vmem:[#allocation7 + $0x18] sm:$0xff]
    %v136 = vld [vmem:[#allocation7 + $0x20] sm:$0xff]
    %v137 = vld [vmem:[#allocation7 + $0x28] sm:$0xff]
    %v138 = vld [vmem:[#allocation7 + $0x30] sm:$0xff]
    %v139 = vld [vmem:[#allocation7 + $0x38] sm:$0xff]
    %v140 = vld [vmem:[#allocation7 + $0x40] sm:$0xff]
    %v141 = vld [vmem:[#allocation7 + $0x48] sm:$0xff]
    %v142 = vld [vmem:[#allocation7 + $0x50] sm:$0xff]
    %v143 = vld [vmem:[#allocation7 + $0x58] sm:$0xff]
    %v144 = vld [vmem:[#allocation7 + $0x60] sm:$0xff]
    %v145 = vld [vmem:[#allocation7 + $0x68] sm:$0xff]
    %v146 = vld [vmem:[#allocation7 + $0x70] sm:$0xff]
    %v147 = vld [vmem:[#allocation7 + $0x78] sm:$0xff]
    %v148 = vld [vmem:[#allocation7 + $0x80] sm:$0xff]
    %v149 = vld [vmem:[#allocation7 + $0x88] sm:$0xff]
    %v150 = vld [vmem:[#allocation7 + $0x90] sm:$0xff]
    %v151 = vld [vmem:[#allocation7 + $0x98] sm:$0xff]
    %v152 = vld [vmem:[#allocation7 + $0xa0] sm:$0xff]
    %v153 = vld [vmem:[#allocation7 + $0xa8] sm:$0xff]
    %v154 = vld [vmem:[#allocation7 + $0xb0] sm:$0xff]
    %v155 = vld [vmem:[#allocation7 + $0xb8] sm:$0xff]
    %v156 = vld [vmem:[#allocation7 + $0xc0] sm:$0xff]
    %v157 = vld [vmem:[#allocation7 + $0xc8] sm:$0xff]
    %v158 = vld [vmem:[#allocation7 + $0xd0] sm:$0xff]
    %v159 = vld [vmem:[#allocation7 + $0xd8] sm:$0xff]
    %v160 = vld [vmem:[#allocation7 + $0xe0] sm:$0xff]
    %v161 = vld [vmem:[#allocation7 + $0xe8] sm:$0xff]
    %v162 = vld [vmem:[#allocation7 + $0xf0] sm:$0xff]
    %v163 = vld [vmem:[#allocation7 + $0xf8] sm:$0xff]
    %v164 = vld [vmem:[%s3] sm:$0xf]
    %v166 = vlaneseq
    %v167 = vshrl.u32 %v166, 7
    %v168 = vsub.s32 0, %v167
    %v169 = vrot.slane %v164, %v168
    %v170 = vlaneseq
    %v171 = vshrl.u32 %v170, 7
    %v172 = vsub.s32 1, %v171
    %v173 = vrot.slane %v164, %v172
    %v174 = vlaneseq
    %v175 = vshrl.u32 %v174, 7
    %v176 = vsub.s32 2, %v175
    %v177 = vrot.slane %v164, %v176
    %v178 = vlaneseq
    %v179 = vshrl.u32 %v178, 7
    %v180 = vsub.s32 3, %v179
    %v181 = vrot.slane %v164, %v180
    %v218 = vunpack.c.l.b16 %v132
    %v219 = vunpack.c.h.b16 %v132
    %v220 = vunpack.c.l.b16 %v133
    %v221 = vunpack.c.h.b16 %v133
    %v222 = vunpack.c.l.b16 %v134
    %v223 = vunpack.c.h.b16 %v134
    %v224 = vunpack.c.l.b16 %v135
    %v225 = vunpack.c.h.b16 %v135
    %v226 = vunpack.c.l.b16 %v136
    %v227 = vunpack.c.h.b16 %v136
    %v228 = vunpack.c.l.b16 %v137
    %v229 = vunpack.c.h.b16 %v137
    %v230 = vunpack.c.l.b16 %v138
    %v231 = vunpack.c.h.b16 %v138
    %v232 = vunpack.c.l.b16 %v139
    %v233 = vunpack.c.h.b16 %v139
    %v234 = vunpack.c.l.b16 %v140
    %v235 = vunpack.c.h.b16 %v140
    %v236 = vunpack.c.l.b16 %v141
    %v237 = vunpack.c.h.b16 %v141
    %v238 = vunpack.c.l.b16 %v142
    %v239 = vunpack.c.h.b16 %v142
    %v240 = vunpack.c.l.b16 %v143
    %v241 = vunpack.c.h.b16 %v143
    %v242 = vunpack.c.l.b16 %v144
    %v243 = vunpack.c.h.b16 %v144
    %v244 = vunpack.c.l.b16 %v145
    %v245 = vunpack.c.h.b16 %v145
    %v246 = vunpack.c.l.b16 %v146
    %v247 = vunpack.c.h.b16 %v146
    %v248 = vunpack.c.l.b16 %v147
    %v249 = vunpack.c.h.b16 %v147
    %v250 = vunpack.c.l.b16 %v148
    %v251 = vunpack.c.h.b16 %v148
    %v252 = vunpack.c.l.b16 %v149
    %v253 = vunpack.c.h.b16 %v149
    %v254 = vunpack.c.l.b16 %v150
    %v255 = vunpack.c.h.b16 %v150
    %v256 = vunpack.c.l.b16 %v151
    %v257 = vunpack.c.h.b16 %v151
    %v258 = vunpack.c.l.b16 %v152
    %v259 = vunpack.c.h.b16 %v152
    %v260 = vunpack.c.l.b16 %v153
    %v261 = vunpack.c.h.b16 %v153
    %v262 = vunpack.c.l.b16 %v154
    %v263 = vunpack.c.h.b16 %v154
    %v264 = vunpack.c.l.b16 %v155
    %v265 = vunpack.c.h.b16 %v155
    %v266 = vunpack.c.l.b16 %v156
    %v267 = vunpack.c.h.b16 %v156
    %v268 = vunpack.c.l.b16 %v157
    %v269 = vunpack.c.h.b16 %v157
    %v270 = vunpack.c.l.b16 %v158
    %v271 = vunpack.c.h.b16 %v158
    %v272 = vunpack.c.l.b16 %v159
    %v273 = vunpack.c.h.b16 %v159
    %v274 = vunpack.c.l.b16 %v160
    %v275 = vunpack.c.h.b16 %v160
    %v276 = vunpack.c.l.b16 %v161
    %v277 = vunpack.c.h.b16 %v161
    %v278 = vunpack.c.l.b16 %v162
    %v279 = vunpack.c.h.b16 %v162
    %v280 = vunpack.c.l.b16 %v163
    %v281 = vunpack.c.h.b16 %v163
    %v282 = vpack.c.b16 %v222, %v218
    %v283 = vpack.c.b16 %v223, %v219
    %v284 = vpack.c.b16 %v224, %v220
    %v285 = vpack.c.b16 %v225, %v221
    %v286 = vpack.c.b16 %v230, %v226
    %v287 = vpack.c.b16 %v231, %v227
    %v288 = vpack.c.b16 %v232, %v228
    %v289 = vpack.c.b16 %v233, %v229
    %v290 = vpack.c.b16 %v238, %v234
    %v291 = vpack.c.b16 %v239, %v235
    %v292 = vpack.c.b16 %v240, %v236
    %v293 = vpack.c.b16 %v241, %v237
    %v294 = vpack.c.b16 %v246, %v242
    %v295 = vpack.c.b16 %v247, %v243
    %v296 = vpack.c.b16 %v248, %v244
    %v297 = vpack.c.b16 %v249, %v245
    %v298 = vpack.c.b16 %v254, %v250
    %v299 = vpack.c.b16 %v255, %v251
    %v300 = vpack.c.b16 %v256, %v252
    %v301 = vpack.c.b16 %v257, %v253
    %v302 = vpack.c.b16 %v262, %v258
    %v303 = vpack.c.b16 %v263, %v259
    %v304 = vpack.c.b16 %v264, %v260
    %v305 = vpack.c.b16 %v265, %v261
    %v306 = vpack.c.b16 %v270, %v266
    %v307 = vpack.c.b16 %v271, %v267
    %v308 = vpack.c.b16 %v272, %v268
    %v309 = vpack.c.b16 %v273, %v269
    %v310 = vpack.c.b16 %v278, %v274
    %v311 = vpack.c.b16 %v279, %v275
    %v312 = vpack.c.b16 %v280, %v276
    %v313 = vpack.c.b16 %v281, %v277
    %346 = vmatprep.subr.bf16.mxu0 %v311
    %347 = vmatpush1.bf16.msra.mxu0 %v310
    %348 = vmatprep.subr.bf16.mxu0 %v307
    %349 = vmatpush1.bf16.msra.mxu0 %v306
    %350 = vmatprep.subr.bf16.mxu0 %v303
    %351 = vmatpush1.bf16.msra.mxu0 %v302
    %352 = vmatprep.subr.bf16.mxu0 %v299
    %353 = vmatpush1.bf16.msra.mxu0 %v298
    %354 = vmatprep.subr.bf16.mxu0 %v295
    %355 = vmatpush1.bf16.msra.mxu0 %v294
    %356 = vmatprep.subr.bf16.mxu0 %v291
    %357 = vmatpush1.bf16.msra.mxu0 %v290
    %358 = vmatprep.subr.bf16.mxu0 %v287
    %359 = vmatpush1.bf16.msra.mxu0 %v286
    %360 = vmatprep.subr.bf16.mxu0 %v283
    %361 = vmatpush1.bf16.msra.mxu0 %v282
    %362 = vmatprep.subr.bf16.mxu0 0
    %363 = vmatpush2.bf16.msra.mxu0 0
    %364 = vmatprep.subr.bf16.mxu0 0
    %365 = vmatpush2.bf16.msra.mxu0 0
    %366 = vmatprep.subr.bf16.mxu0 0
    %367 = vmatpush2.bf16.msra.mxu0 0
    %368 = vmatprep.subr.bf16.mxu0 0
    %369 = vmatpush2.bf16.msra.mxu0 0
    %370 = vmatprep.subr.bf16.mxu0 0
    %371 = vmatpush2.bf16.msra.mxu0 0
    %372 = vmatprep.subr.bf16.mxu0 0
    %373 = vmatpush2.bf16.msra.mxu0 0
    %374 = vmatprep.subr.bf16.mxu0 0
    %375 = vmatpush2.bf16.msra.mxu0 0
    %376 = vmatprep.subr.bf16.mxu0 0
    %377 = vmatpush2.bf16.msra.mxu0 0
    %378 = vmatprep.mubr.bf16.mxu0 0
    %379 = vmatmul.mubr.bf16.gmra.mxu0 %v131
    %v380 = vpop.f32.mrf.mxu0
    %v381 = vadd.f32 %v169, %v380
    %v382 = vpop.f32.mrf.mxu0
    %v383 = vadd.f32 %v173, %v382
    %v384 = vpop.f32.mrf.mxu0
    %v385 = vpop.f32.mrf.mxu0
    %386 = vdwg.mxu0
    %387 = vmatprep.subr.bf16.mxu0 %v313
    %388 = vmatpush1.bf16.msra.mxu0 %v312
    %389 = vmatprep.subr.bf16.mxu0 %v309
    %390 = vmatpush1.bf16.msra.mxu0 %v308
    %391 = vmatprep.subr.bf16.mxu0 %v305
    %392 = vmatpush1.bf16.msra.mxu0 %v304
    %393 = vmatprep.subr.bf16.mxu0 %v301
    %394 = vmatpush1.bf16.msra.mxu0 %v300
    %395 = vmatprep.subr.bf16.mxu0 %v297
    %396 = vmatpush1.bf16.msra.mxu0 %v296
    %397 = vmatprep.subr.bf16.mxu0 %v293
    %398 = vmatpush1.bf16.msra.mxu0 %v292
    %399 = vmatprep.subr.bf16.mxu0 %v289
    %400 = vmatpush1.bf16.msra.mxu0 %v288
    %401 = vmatprep.subr.bf16.mxu0 %v285
    %402 = vmatpush1.bf16.msra.mxu0 %v284
    %403 = vmatprep.subr.bf16.mxu0 0
    %404 = vmatpush2.bf16.msra.mxu0 0
    %405 = vmatprep.subr.bf16.mxu0 0
    %406 = vmatpush2.bf16.msra.mxu0 0
    %407 = vmatprep.subr.bf16.mxu0 0
    %408 = vmatpush2.bf16.msra.mxu0 0
    %409 = vmatprep.subr.bf16.mxu0 0
    %410 = vmatpush2.bf16.msra.mxu0 0
    %411 = vmatprep.subr.bf16.mxu0 0
    %412 = vmatpush2.bf16.msra.mxu0 0
    %413 = vmatprep.subr.bf16.mxu0 0
    %414 = vmatpush2.bf16.msra.mxu0 0
    %415 = vmatprep.subr.bf16.mxu0 0
    %416 = vmatpush2.bf16.msra.mxu0 0
    %417 = vmatprep.subr.bf16.mxu0 0
    %418 = vmatpush2.bf16.msra.mxu0 0
    %419 = vmatprep.mubr.bf16.mxu0 0
    %420 = vmatmul.mubr.bf16.gmra.mxu0 %v131
    %v421 = vpop.f32.mrf.mxu0
    %v422 = vadd.f32 %v177, %v421
    %v423 = vpop.f32.mrf.mxu0
    %v424 = vadd.f32 %v181, %v423
    %v425 = vpop.f32.mrf.mxu0
    %v426 = vpop.f32.mrf.mxu0
    %427 = vdwg.mxu0
    %v428 = vmax.f32 %v381, 0.0
    %v429 = vmax.f32 %v383, 0.0
    %v430 = vmax.f32 %v422, 0.0
    %v431 = vmax.f32 %v424, 0.0
    %v432 = vpack.c.bf16 %v428, %v428
    %v433 = vpack.c.bf16 %v429, %v429
    %v434 = vpack.c.bf16 %v430, %v430
    %v435 = vpack.c.bf16 %v431, %v431
    %v436 = vld [vmem:[#allocation8] sm:$0xff]
    %v437 = vld [vmem:[#allocation8 + $0x8] sm:$0xff]
    %v438 = vld [vmem:[#allocation8 + $0x10] sm:$0xff]
    %v439 = vld [vmem:[#allocation8 + $0x18] sm:$0xff]
    %v440 = vld [vmem:[#allocation8 + $0x20] sm:$0xff]
    %v441 = vld [vmem:[#allocation8 + $0x28] sm:$0xff]
    %v442 = vld [vmem:[#allocation8 + $0x30] sm:$0xff]
    %v443 = vld [vmem:[#allocation8 + $0x38] sm:$0xff]
    %v444 = vld [vmem:[#allocation8 + $0x40] sm:$0xff]
    %v445 = vld [vmem:[#allocation8 + $0x48] sm:$0xff]
    %v446 = vld [vmem:[#allocation8 + $0x50] sm:$0xff]
    %v447 = vld [vmem:[#allocation8 + $0x58] sm:$0xff]
    %v448 = vld [vmem:[#allocation8 + $0x60] sm:$0xff]
    %v449 = vld [vmem:[#allocation8 + $0x68] sm:$0xff]
    %v450 = vld [vmem:[#allocation8 + $0x70] sm:$0xff]
    %v451 = vld [vmem:[#allocation8 + $0x78] sm:$0xff]
    %v452 = vld [vmem:[#allocation8 + $0x80] sm:$0xff]
    %v453 = vld [vmem:[#allocation8 + $0x88] sm:$0xff]
    %v454 = vld [vmem:[#allocation8 + $0x90] sm:$0xff]
    %v455 = vld [vmem:[#allocation8 + $0x98] sm:$0xff]
    %v456 = vld [vmem:[#allocation8 + $0xa0] sm:$0xff]
    %v457 = vld [vmem:[#allocation8 + $0xa8] sm:$0xff]
    %v458 = vld [vmem:[#allocation8 + $0xb0] sm:$0xff]
    %v459 = vld [vmem:[#allocation8 + $0xb8] sm:$0xff]
    %v460 = vld [vmem:[#allocation8 + $0xc0] sm:$0xff]
    %v461 = vld [vmem:[#allocation8 + $0xc8] sm:$0xff]
    %v462 = vld [vmem:[#allocation8 + $0xd0] sm:$0xff]
    %v463 = vld [vmem:[#allocation8 + $0xd8] sm:$0xff]
    %v464 = vld [vmem:[#allocation8 + $0xe0] sm:$0xff]
    %v465 = vld [vmem:[#allocation8 + $0xe8] sm:$0xff]
    %v466 = vld [vmem:[#allocation8 + $0xf0] sm:$0xff]
    %v467 = vld [vmem:[#allocation8 + $0xf8] sm:$0xff]
    %v468 = vld [vmem:[#allocation8 + $0x100] sm:$0xff]
    %v469 = vld [vmem:[#allocation8 + $0x108] sm:$0xff]
    %v470 = vld [vmem:[#allocation8 + $0x110] sm:$0xff]
    %v471 = vld [vmem:[#allocation8 + $0x118] sm:$0xff]
    %v472 = vld [vmem:[#allocation8 + $0x120] sm:$0xff]
    %v473 = vld [vmem:[#allocation8 + $0x128] sm:$0xff]
    %v474 = vld [vmem:[#allocation8 + $0x130] sm:$0xff]
    %v475 = vld [vmem:[#allocation8 + $0x138] sm:$0xff]
    %v476 = vld [vmem:[#allocation8 + $0x140] sm:$0xff]
    %v477 = vld [vmem:[#allocation8 + $0x148] sm:$0xff]
    %v478 = vld [vmem:[#allocation8 + $0x150] sm:$0xff]
    %v479 = vld [vmem:[#allocation8 + $0x158] sm:$0xff]
    %v480 = vld [vmem:[#allocation8 + $0x160] sm:$0xff]
    %v481 = vld [vmem:[#allocation8 + $0x168] sm:$0xff]
    %v482 = vld [vmem:[#allocation8 + $0x170] sm:$0xff]
    %v483 = vld [vmem:[#allocation8 + $0x178] sm:$0xff]
    %v484 = vld [vmem:[#allocation8 + $0x180] sm:$0xff]
    %v485 = vld [vmem:[#allocation8 + $0x188] sm:$0xff]
    %v486 = vld [vmem:[#allocation8 + $0x190] sm:$0xff]
    %v487 = vld [vmem:[#allocation8 + $0x198] sm:$0xff]
    %v488 = vld [vmem:[#allocation8 + $0x1a0] sm:$0xff]
    %v489 = vld [vmem:[#allocation8 + $0x1a8] sm:$0xff]
    %v490 = vld [vmem:[#allocation8 + $0x1b0] sm:$0xff]
    %v491 = vld [vmem:[#allocation8 + $0x1b8] sm:$0xff]
    %v492 = vld [vmem:[#allocation8 + $0x1c0] sm:$0xff]
    %v493 = vld [vmem:[#allocation8 + $0x1c8] sm:$0xff]
    %v494 = vld [vmem:[#allocation8 + $0x1d0] sm:$0xff]
    %v495 = vld [vmem:[#allocation8 + $0x1d8] sm:$0xff]
    %v496 = vld [vmem:[#allocation8 + $0x1e0] sm:$0xff]
    %v497 = vld [vmem:[#allocation8 + $0x1e8] sm:$0xff]
    %v498 = vld [vmem:[#allocation8 + $0x1f0] sm:$0xff]
    %v499 = vld [vmem:[#allocation8 + $0x1f8] sm:$0xff]
    %v500 = vld [vmem:[#allocation10] sm:$0x3]
    %v502 = vlaneseq
    %v503 = vshrl.u32 %v502, 7
    %v504 = vsub.s32 0, %v503
    %v505 = vrot.slane %v500, %v504
    %v506 = vlaneseq
    %v507 = vshrl.u32 %v506, 7
    %v508 = vsub.s32 1, %v507
    %v509 = vrot.slane %v500, %v508
    %v576 = vunpack.c.l.b16 %v436
    %v577 = vunpack.c.h.b16 %v436
    %v578 = vunpack.c.l.b16 %v437
    %v579 = vunpack.c.h.b16 %v437
    %v580 = vunpack.c.l.b16 %v438
    %v581 = vunpack.c.h.b16 %v438
    %v582 = vunpack.c.l.b16 %v439
    %v583 = vunpack.c.h.b16 %v439
    %v584 = vunpack.c.l.b16 %v440
    %v585 = vunpack.c.h.b16 %v440
    %v586 = vunpack.c.l.b16 %v441
    %v587 = vunpack.c.h.b16 %v441
    %v588 = vunpack.c.l.b16 %v442
    %v589 = vunpack.c.h.b16 %v442
    %v590 = vunpack.c.l.b16 %v443
    %v591 = vunpack.c.h.b16 %v443
    %v592 = vunpack.c.l.b16 %v444
    %v593 = vunpack.c.h.b16 %v444
    %v594 = vunpack.c.l.b16 %v445
    %v595 = vunpack.c.h.b16 %v445
    %v596 = vunpack.c.l.b16 %v446
    %v597 = vunpack.c.h.b16 %v446
    %v598 = vunpack.c.l.b16 %v447
    %v599 = vunpack.c.h.b16 %v447
    %v600 = vunpack.c.l.b16 %v448
    %v601 = vunpack.c.h.b16 %v448
    %v602 = vunpack.c.l.b16 %v449
    %v603 = vunpack.c.h.b16 %v449
    %v604 = vunpack.c.l.b16 %v450
    %v605 = vunpack.c.h.b16 %v450
    %v606 = vunpack.c.l.b16 %v451
    %v607 = vunpack.c.h.b16 %v451
    %v608 = vunpack.c.l.b16 %v452
    %v609 = vunpack.c.h.b16 %v452
    %v610 = vunpack.c.l.b16 %v453
    %v611 = vunpack.c.h.b16 %v453
    %v612 = vunpack.c.l.b16 %v454
    %v613 = vunpack.c.h.b16 %v454
    %v614 = vunpack.c.l.b16 %v455
    %v615 = vunpack.c.h.b16 %v455
    %v616 = vunpack.c.l.b16 %v456
    %v617 = vunpack.c.h.b16 %v456
    %v618 = vunpack.c.l.b16 %v457
    %v619 = vunpack.c.h.b16 %v457
    %v620 = vunpack.c.l.b16 %v458
    %v621 = vunpack.c.h.b16 %v458
    %v622 = vunpack.c.l.b16 %v459
    %v623 = vunpack.c.h.b16 %v459
    %v624 = vunpack.c.l.b16 %v460
    %v625 = vunpack.c.h.b16 %v460
    %v626 = vunpack.c.l.b16 %v461
    %v627 = vunpack.c.h.b16 %v461
    %v628 = vunpack.c.l.b16 %v462
    %v629 = vunpack.c.h.b16 %v462
    %v630 = vunpack.c.l.b16 %v463
    %v631 = vunpack.c.h.b16 %v463
    %v632 = vunpack.c.l.b16 %v464
    %v633 = vunpack.c.h.b16 %v464
    %v634 = vunpack.c.l.b16 %v465
    %v635 = vunpack.c.h.b16 %v465
    %v636 = vunpack.c.l.b16 %v466
    %v637 = vunpack.c.h.b16 %v466
    %v638 = vunpack.c.l.b16 %v467
    %v639 = vunpack.c.h.b16 %v467
    %v640 = vunpack.c.l.b16 %v468
    %v641 = vunpack.c.h.b16 %v468
    %v642 = vunpack.c.l.b16 %v469
    %v643 = vunpack.c.h.b16 %v469
    %v644 = vunpack.c.l.b16 %v470
    %v645 = vunpack.c.h.b16 %v470
    %v646 = vunpack.c.l.b16 %v471
    %v647 = vunpack.c.h.b16 %v471
    %v648 = vunpack.c.l.b16 %v472
    %v649 = vunpack.c.h.b16 %v472
    %v650 = vunpack.c.l.b16 %v473
    %v651 = vunpack.c.h.b16 %v473
    %v652 = vunpack.c.l.b16 %v474
    %v653 = vunpack.c.h.b16 %v474
    %v654 = vunpack.c.l.b16 %v475
    %v655 = vunpack.c.h.b16 %v475
    %v656 = vunpack.c.l.b16 %v476
    %v657 = vunpack.c.h.b16 %v476
    %v658 = vunpack.c.l.b16 %v477
    %v659 = vunpack.c.h.b16 %v477
    %v660 = vunpack.c.l.b16 %v478
    %v661 = vunpack.c.h.b16 %v478
    %v662 = vunpack.c.l.b16 %v479
    %v663 = vunpack.c.h.b16 %v479
    %v664 = vunpack.c.l.b16 %v480
    %v665 = vunpack.c.h.b16 %v480
    %v666 = vunpack.c.l.b16 %v481
    %v667 = vunpack.c.h.b16 %v481
    %v668 = vunpack.c.l.b16 %v482
    %v669 = vunpack.c.h.b16 %v482
    %v670 = vunpack.c.l.b16 %v483
    %v671 = vunpack.c.h.b16 %v483
    %v672 = vunpack.c.l.b16 %v484
    %v673 = vunpack.c.h.b16 %v484
    %v674 = vunpack.c.l.b16 %v485
    %v675 = vunpack.c.h.b16 %v485
    %v676 = vunpack.c.l.b16 %v486
    %v677 = vunpack.c.h.b16 %v486
    %v678 = vunpack.c.l.b16 %v487
    %v679 = vunpack.c.h.b16 %v487
    %v680 = vunpack.c.l.b16 %v488
    %v681 = vunpack.c.h.b16 %v488
    %v682 = vunpack.c.l.b16 %v489
    %v683 = vunpack.c.h.b16 %v489
    %v684 = vunpack.c.l.b16 %v490
    %v685 = vunpack.c.h.b16 %v490
    %v686 = vunpack.c.l.b16 %v491
    %v687 = vunpack.c.h.b16 %v491
    %v688 = vunpack.c.l.b16 %v492
    %v689 = vunpack.c.h.b16 %v492
    %v690 = vunpack.c.l.b16 %v493
    %v691 = vunpack.c.h.b16 %v493
    %v692 = vunpack.c.l.b16 %v494
    %v693 = vunpack.c.h.b16 %v494
    %v694 = vunpack.c.l.b16 %v495
    %v695 = vunpack.c.h.b16 %v495
    %v696 = vunpack.c.l.b16 %v496
    %v697 = vunpack.c.h.b16 %v496
    %v698 = vunpack.c.l.b16 %v497
    %v699 = vunpack.c.h.b16 %v497
    %v700 = vunpack.c.l.b16 %v498
    %v701 = vunpack.c.h.b16 %v498
    %v702 = vunpack.c.l.b16 %v499
    %v703 = vunpack.c.h.b16 %v499
    %v704 = vpack.c.b16 %v578, %v576
    %v705 = vpack.c.b16 %v579, %v577
    %v706 = vpack.c.b16 %v582, %v580
    %v707 = vpack.c.b16 %v583, %v581
    %v708 = vpack.c.b16 %v586, %v584
    %v709 = vpack.c.b16 %v587, %v585
    %v710 = vpack.c.b16 %v590, %v588
    %v711 = vpack.c.b16 %v591, %v589
    %v712 = vpack.c.b16 %v594, %v592
    %v713 = vpack.c.b16 %v595, %v593
    %v714 = vpack.c.b16 %v598, %v596
    %v715 = vpack.c.b16 %v599, %v597
    %v716 = vpack.c.b16 %v602, %v600
    %v717 = vpack.c.b16 %v603, %v601
    %v718 = vpack.c.b16 %v606, %v604
    %v719 = vpack.c.b16 %v607, %v605
    %v720 = vpack.c.b16 %v610, %v608
    %v721 = vpack.c.b16 %v611, %v609
    %v722 = vpack.c.b16 %v614, %v612
    %v723 = vpack.c.b16 %v615, %v613
    %v724 = vpack.c.b16 %v618, %v616
    %v725 = vpack.c.b16 %v619, %v617
    %v726 = vpack.c.b16 %v622, %v620
    %v727 = vpack.c.b16 %v623, %v621
    %v728 = vpack.c.b16 %v626, %v624
    %v729 = vpack.c.b16 %v627, %v625
    %v730 = vpack.c.b16 %v630, %v628
    %v731 = vpack.c.b16 %v631, %v629
    %v732 = vpack.c.b16 %v634, %v632
    %v733 = vpack.c.b16 %v635, %v633
    %v734 = vpack.c.b16 %v638, %v636
    %v735 = vpack.c.b16 %v639, %v637
    %v736 = vpack.c.b16 %v642, %v640
    %v737 = vpack.c.b16 %v643, %v641
    %v738 = vpack.c.b16 %v646, %v644
    %v739 = vpack.c.b16 %v647, %v645
    %v740 = vpack.c.b16 %v650, %v648
    %v741 = vpack.c.b16 %v651, %v649
    %v742 = vpack.c.b16 %v654, %v652
    %v743 = vpack.c.b16 %v655, %v653
    %v744 = vpack.c.b16 %v658, %v656
    %v745 = vpack.c.b16 %v659, %v657
    %v746 = vpack.c.b16 %v662, %v660
    %v747 = vpack.c.b16 %v663, %v661
    %v748 = vpack.c.b16 %v666, %v664
    %v749 = vpack.c.b16 %v667, %v665
    %v750 = vpack.c.b16 %v670, %v668
    %v751 = vpack.c.b16 %v671, %v669
    %v752 = vpack.c.b16 %v674, %v672
    %v753 = vpack.c.b16 %v675, %v673
    %v754 = vpack.c.b16 %v678, %v676
    %v755 = vpack.c.b16 %v679, %v677
    %v756 = vpack.c.b16 %v682, %v680
    %v757 = vpack.c.b16 %v683, %v681
    %v758 = vpack.c.b16 %v686, %v684
    %v759 = vpack.c.b16 %v687, %v685
    %v760 = vpack.c.b16 %v690, %v688
    %v761 = vpack.c.b16 %v691, %v689
    %v762 = vpack.c.b16 %v694, %v692
    %v763 = vpack.c.b16 %v695, %v693
    %v764 = vpack.c.b16 %v698, %v696
    %v765 = vpack.c.b16 %v699, %v697
    %v766 = vpack.c.b16 %v702, %v700
    %v767 = vpack.c.b16 %v703, %v701
    %832 = vmatprep.subr.bf16.mxu0 %v719
    %833 = vmatpush1.bf16.msra.mxu0 %v718
    %834 = vmatprep.subr.bf16.mxu0 %v717
    %835 = vmatpush1.bf16.msra.mxu0 %v716
    %836 = vmatprep.subr.bf16.mxu0 %v715
    %837 = vmatpush1.bf16.msra.mxu0 %v714
    %838 = vmatprep.subr.bf16.mxu0 %v713
    %839 = vmatpush1.bf16.msra.mxu0 %v712
    %840 = vmatprep.subr.bf16.mxu0 %v711
    %841 = vmatpush1.bf16.msra.mxu0 %v710
    %842 = vmatprep.subr.bf16.mxu0 %v709
    %843 = vmatpush1.bf16.msra.mxu0 %v708
    %844 = vmatprep.subr.bf16.mxu0 %v707
    %845 = vmatpush1.bf16.msra.mxu0 %v706
    %846 = vmatprep.subr.bf16.mxu0 %v705
    %847 = vmatpush1.bf16.msra.mxu0 %v704
    %848 = vmatprep.subr.bf16.mxu0 %v735
    %849 = vmatpush2.bf16.msra.mxu0 %v734
    %850 = vmatprep.subr.bf16.mxu0 %v733
    %851 = vmatpush2.bf16.msra.mxu0 %v732
    %852 = vmatprep.subr.bf16.mxu0 %v731
    %853 = vmatpush2.bf16.msra.mxu0 %v730
    %854 = vmatprep.subr.bf16.mxu0 %v729
    %855 = vmatpush2.bf16.msra.mxu0 %v728
    %856 = vmatprep.subr.bf16.mxu0 %v727
    %857 = vmatpush2.bf16.msra.mxu0 %v726
    %858 = vmatprep.subr.bf16.mxu0 %v725
    %859 = vmatpush2.bf16.msra.mxu0 %v724
    %860 = vmatprep.subr.bf16.mxu0 %v723
    %861 = vmatpush2.bf16.msra.mxu0 %v722
    %862 = vmatprep.subr.bf16.mxu0 %v721
    %863 = vmatpush2.bf16.msra.mxu0 %v720
    %864 = vmatprep.mubr.bf16.mxu0 %v433
    %865 = vmatmul.mubr.bf16.gmra.mxu0 %v432
    %v866 = vpop.f32.mrf.mxu0
    %v867 = vadd.f32 %v505, %v866
    %v868 = vpop.f32.mrf.mxu0
    %v869 = vadd.f32 %v509, %v868
    %v870 = vpop.f32.mrf.mxu0
    %v871 = vpop.f32.mrf.mxu0
    %872 = vdwg.mxu0
    %873 = vmatprep.subr.bf16.mxu0 %v751
    %874 = vmatpush1.bf16.msra.mxu0 %v750
    %875 = vmatprep.subr.bf16.mxu0 %v749
    %876 = vmatpush1.bf16.msra.mxu0 %v748
    %877 = vmatprep.subr.bf16.mxu0 %v747
    %878 = vmatpush1.bf16.msra.mxu0 %v746
    %879 = vmatprep.subr.bf16.mxu0 %v745
    %880 = vmatpush1.bf16.msra.mxu0 %v744
    %881 = vmatprep.subr.bf16.mxu0 %v743
    %882 = vmatpush1.bf16.msra.mxu0 %v742
    %883 = vmatprep.subr.bf16.mxu0 %v741
    %884 = vmatpush1.bf16.msra.mxu0 %v740
    %885 = vmatprep.subr.bf16.mxu0 %v739
    %886 = vmatpush1.bf16.msra.mxu0 %v738
    %887 = vmatprep.subr.bf16.mxu0 %v737
    %888 = vmatpush1.bf16.msra.mxu0 %v736
    %889 = vmatprep.subr.bf16.mxu0 %v767
    %890 = vmatpush2.bf16.msra.mxu0 %v766
    %891 = vmatprep.subr.bf16.mxu0 %v765
    %892 = vmatpush2.bf16.msra.mxu0 %v764
    %893 = vmatprep.subr.bf16.mxu0 %v763
    %894 = vmatpush2.bf16.msra.mxu0 %v762
    %895 = vmatprep.subr.bf16.mxu0 %v761
    %896 = vmatpush2.bf16.msra.mxu0 %v760
    %897 = vmatprep.subr.bf16.mxu0 %v759
    %898 = vmatpush2.bf16.msra.mxu0 %v758
    %899 = vmatprep.subr.bf16.mxu0 %v757
    %900 = vmatpush2.bf16.msra.mxu0 %v756
    %901 = vmatprep.subr.bf16.mxu0 %v755
    %902 = vmatpush2.bf16.msra.mxu0 %v754
    %903 = vmatprep.subr.bf16.mxu0 %v753
    %904 = vmatpush2.bf16.msra.mxu0 %v752
    %905 = vmatprep.mubr.bf16.mxu0 %v435
    %906 = vmatmul.mubr.bf16.gmra.mxu0 %v434
    %v907 = vpop.f32.mrf.mxu0
    %v908 = vadd.f32 %v867, %v907
    %v909 = vpop.f32.mrf.mxu0
    %v910 = vadd.f32 %v869, %v909
    %v911 = vpop.f32.mrf.mxu0
    %v912 = vpop.f32.mrf.mxu0
    %913 = vdwg.mxu0
    %v914 = vmul.f32 %v910, 0.5
    %v915 = vmul.f32 %v914, 1.442695
    %v916 = vpow.pop %v915
    %v917 = vld [vmem:[#allocation5] sm:$0xff]
    %v918 = vmul.f32 %v916, %v917
    %v919 = vadd.f32 %v918, %v908
    %v920 = vpack.c.bf16 %v919, %v919
    %v921 = vld [vmem:[#allocation11] sm:$0xff]
    %v922 = vld [vmem:[#allocation11 + $0x8] sm:$0xff]
    %v923 = vld [vmem:[#allocation11 + $0x10] sm:$0xff]
    %v924 = vld [vmem:[#allocation11 + $0x18] sm:$0xff]
    %v925 = vld [vmem:[#allocation11 + $0x20] sm:$0xff]
    %v926 = vld [vmem:[#allocation11 + $0x28] sm:$0xff]
    %v927 = vld [vmem:[#allocation11 + $0x30] sm:$0xff]
    %v928 = vld [vmem:[#allocation11 + $0x38] sm:$0xff]
    %v929 = vld [vmem:[#allocation11 + $0x40] sm:$0xff]
    %v930 = vld [vmem:[#allocation11 + $0x48] sm:$0xff]
    %v931 = vld [vmem:[#allocation11 + $0x50] sm:$0xff]
    %v932 = vld [vmem:[#allocation11 + $0x58] sm:$0xff]
    %v933 = vld [vmem:[#allocation11 + $0x60] sm:$0xff]
    %v934 = vld [vmem:[#allocation11 + $0x68] sm:$0xff]
    %v935 = vld [vmem:[#allocation11 + $0x70] sm:$0xff]
    %v936 = vld [vmem:[#allocation11 + $0x78] sm:$0xff]
    %v937 = vld [vmem:[#allocation11 + $0x80] sm:$0xff]
    %v938 = vld [vmem:[#allocation11 + $0x88] sm:$0xff]
    %v939 = vld [vmem:[#allocation11 + $0x90] sm:$0xff]
    %v940 = vld [vmem:[#allocation11 + $0x98] sm:$0xff]
    %v941 = vld [vmem:[#allocation11 + $0xa0] sm:$0xff]
    %v942 = vld [vmem:[#allocation11 + $0xa8] sm:$0xff]
    %v943 = vld [vmem:[#allocation11 + $0xb0] sm:$0xff]
    %v944 = vld [vmem:[#allocation11 + $0xb8] sm:$0xff]
    %v945 = vld [vmem:[#allocation11 + $0xc0] sm:$0xff]
    %v946 = vld [vmem:[#allocation11 + $0xc8] sm:$0xff]
    %v947 = vld [vmem:[#allocation11 + $0xd0] sm:$0xff]
    %v948 = vld [vmem:[#allocation11 + $0xd8] sm:$0xff]
    %v949 = vld [vmem:[#allocation11 + $0xe0] sm:$0xff]
    %v950 = vld [vmem:[#allocation11 + $0xe8] sm:$0xff]
    %v951 = vld [vmem:[#allocation11 + $0xf0] sm:$0xff]
    %v952 = vld [vmem:[#allocation11 + $0xf8] sm:$0xff]
    %v953 = vld [vmem:[%s7] sm:$0xf]
    %v955 = vlaneseq
    %v956 = vshrl.u32 %v955, 7
    %v957 = vsub.s32 0, %v956
    %v958 = vrot.slane %v953, %v957
    %v959 = vlaneseq
    %v960 = vshrl.u32 %v959, 7
    %v961 = vsub.s32 1, %v960
    %v962 = vrot.slane %v953, %v961
    %v963 = vlaneseq
    %v964 = vshrl.u32 %v963, 7
    %v965 = vsub.s32 2, %v964
    %v966 = vrot.slane %v953, %v965
    %v967 = vlaneseq
    %v968 = vshrl.u32 %v967, 7
    %v969 = vsub.s32 3, %v968
    %v970 = vrot.slane %v953, %v969
    %v1007 = vunpack.c.l.b16 %v921
    %v1008 = vunpack.c.h.b16 %v921
    %v1009 = vunpack.c.l.b16 %v922
    %v1010 = vunpack.c.h.b16 %v922
    %v1011 = vunpack.c.l.b16 %v923
    %v1012 = vunpack.c.h.b16 %v923
    %v1013 = vunpack.c.l.b16 %v924
    %v1014 = vunpack.c.h.b16 %v924
    %v1015 = vunpack.c.l.b16 %v925
    %v1016 = vunpack.c.h.b16 %v925
    %v1017 = vunpack.c.l.b16 %v926
    %v1018 = vunpack.c.h.b16 %v926
    %v1019 = vunpack.c.l.b16 %v927
    %v1020 = vunpack.c.h.b16 %v927
    %v1021 = vunpack.c.l.b16 %v928
    %v1022 = vunpack.c.h.b16 %v928
    %v1023 = vunpack.c.l.b16 %v929
    %v1024 = vunpack.c.h.b16 %v929
    %v1025 = vunpack.c.l.b16 %v930
    %v1026 = vunpack.c.h.b16 %v930
    %v1027 = vunpack.c.l.b16 %v931
    %v1028 = vunpack.c.h.b16 %v931
    %v1029 = vunpack.c.l.b16 %v932
    %v1030 = vunpack.c.h.b16 %v932
    %v1031 = vunpack.c.l.b16 %v933
    %v1032 = vunpack.c.h.b16 %v933
    %v1033 = vunpack.c.l.b16 %v934
    %v1034 = vunpack.c.h.b16 %v934
    %v1035 = vunpack.c.l.b16 %v935
    %v1036 = vunpack.c.h.b16 %v935
    %v1037 = vunpack.c.l.b16 %v936
    %v1038 = vunpack.c.h.b16 %v936
    %v1039 = vunpack.c.l.b16 %v937
    %v1040 = vunpack.c.h.b16 %v937
    %v1041 = vunpack.c.l.b16 %v938
    %v1042 = vunpack.c.h.b16 %v938
    %v1043 = vunpack.c.l.b16 %v939
    %v1044 = vunpack.c.h.b16 %v939
    %v1045 = vunpack.c.l.b16 %v940
    %v1046 = vunpack.c.h.b16 %v940
    %v1047 = vunpack.c.l.b16 %v941
    %v1048 = vunpack.c.h.b16 %v941
    %v1049 = vunpack.c.l.b16 %v942
    %v1050 = vunpack.c.h.b16 %v942
    %v1051 = vunpack.c.l.b16 %v943
    %v1052 = vunpack.c.h.b16 %v943
    %v1053 = vunpack.c.l.b16 %v944
    %v1054 = vunpack.c.h.b16 %v944
    %v1055 = vunpack.c.l.b16 %v945
    %v1056 = vunpack.c.h.b16 %v945
    %v1057 = vunpack.c.l.b16 %v946
    %v1058 = vunpack.c.h.b16 %v946
    %v1059 = vunpack.c.l.b16 %v947
    %v1060 = vunpack.c.h.b16 %v947
    %v1061 = vunpack.c.l.b16 %v948
    %v1062 = vunpack.c.h.b16 %v948
    %v1063 = vunpack.c.l.b16 %v949
    %v1064 = vunpack.c.h.b16 %v949
    %v1065 = vunpack.c.l.b16 %v950
    %v1066 = vunpack.c.h.b16 %v950
    %v1067 = vunpack.c.l.b16 %v951
    %v1068 = vunpack.c.h.b16 %v951
    %v1069 = vunpack.c.l.b16 %v952
    %v1070 = vunpack.c.h.b16 %v952
    %v1071 = vpack.c.b16 %v1011, %v1007
    %v1072 = vpack.c.b16 %v1012, %v1008
    %v1073 = vpack.c.b16 %v1013, %v1009
    %v1074 = vpack.c.b16 %v1014, %v1010
    %v1075 = vpack.c.b16 %v1019, %v1015
    %v1076 = vpack.c.b16 %v1020, %v1016
    %v1077 = vpack.c.b16 %v1021, %v1017
    %v1078 = vpack.c.b16 %v1022, %v1018
    %v1079 = vpack.c.b16 %v1027, %v1023
    %v1080 = vpack.c.b16 %v1028, %v1024
    %v1081 = vpack.c.b16 %v1029, %v1025
    %v1082 = vpack.c.b16 %v1030, %v1026
    %v1083 = vpack.c.b16 %v1035, %v1031
    %v1084 = vpack.c.b16 %v1036, %v1032
    %v1085 = vpack.c.b16 %v1037, %v1033
    %v1086 = vpack.c.b16 %v1038, %v1034
    %v1087 = vpack.c.b16 %v1043, %v1039
    %v1088 = vpack.c.b16 %v1044, %v1040
    %v1089 = vpack.c.b16 %v1045, %v1041
    %v1090 = vpack.c.b16 %v1046, %v1042
    %v1091 = vpack.c.b16 %v1051, %v1047
    %v1092 = vpack.c.b16 %v1052, %v1048
    %v1093 = vpack.c.b16 %v1053, %v1049
    %v1094 = vpack.c.b16 %v1054, %v1050
    %v1095 = vpack.c.b16 %v1059, %v1055
    %v1096 = vpack.c.b16 %v1060, %v1056
    %v1097 = vpack.c.b16 %v1061, %v1057
    %v1098 = vpack.c.b16 %v1062, %v1058
    %v1099 = vpack.c.b16 %v1067, %v1063
    %v1100 = vpack.c.b16 %v1068, %v1064
    %v1101 = vpack.c.b16 %v1069, %v1065
    %v1102 = vpack.c.b16 %v1070, %v1066
    %1135 = vmatprep.subr.bf16.mxu0 %v1100
    %1136 = vmatpush1.bf16.msra.mxu0 %v1099
    %1137 = vmatprep.subr.bf16.mxu0 %v1096
    %1138 = vmatpush1.bf16.msra.mxu0 %v1095
    %1139 = vmatprep.subr.bf16.mxu0 %v1092
    %1140 = vmatpush1.bf16.msra.mxu0 %v1091
    %1141 = vmatprep.subr.bf16.mxu0 %v1088
    %1142 = vmatpush1.bf16.msra.mxu0 %v1087
    %1143 = vmatprep.subr.bf16.mxu0 %v1084
    %1144 = vmatpush1.bf16.msra.mxu0 %v1083
    %1145 = vmatprep.subr.bf16.mxu0 %v1080
    %1146 = vmatpush1.bf16.msra.mxu0 %v1079
    %1147 = vmatprep.subr.bf16.mxu0 %v1076
    %1148 = vmatpush1.bf16.msra.mxu0 %v1075
    %1149 = vmatprep.subr.bf16.mxu0 %v1072
    %1150 = vmatpush1.bf16.msra.mxu0 %v1071
    %1151 = vmatprep.subr.bf16.mxu0 0
    %1152 = vmatpush2.bf16.msra.mxu0 0
    %1153 = vmatprep.subr.bf16.mxu0 0
    %1154 = vmatpush2.bf16.msra.mxu0 0
    %1155 = vmatprep.subr.bf16.mxu0 0
    %1156 = vmatpush2.bf16.msra.mxu0 0
    %1157 = vmatprep.subr.bf16.mxu0 0
    %1158 = vmatpush2.bf16.msra.mxu0 0
    %1159 = vmatprep.subr.bf16.mxu0 0
    %1160 = vmatpush2.bf16.msra.mxu0 0
    %1161 = vmatprep.subr.bf16.mxu0 0
    %1162 = vmatpush2.bf16.msra.mxu0 0
    %1163 = vmatprep.subr.bf16.mxu0 0
    %1164 = vmatpush2.bf16.msra.mxu0 0
    %1165 = vmatprep.subr.bf16.mxu0 0
    %1166 = vmatpush2.bf16.msra.mxu0 0
    %1167 = vmatprep.mubr.bf16.mxu0 0
    %1168 = vmatmul.mubr.bf16.gmra.mxu0 %v920
    %v1169 = vpop.f32.mrf.mxu0
    %v1170 = vadd.f32 %v958, %v1169
    %v1171 = vpop.f32.mrf.mxu0
    %v1172 = vadd.f32 %v962, %v1171
    %v1173 = vpop.f32.mrf.mxu0
    %v1174 = vpop.f32.mrf.mxu0
    %1175 = vdwg.mxu0
    %1176 = vmatprep.subr.bf16.mxu0 %v1102
    %1177 = vmatpush1.bf16.msra.mxu0 %v1101
    %1178 = vmatprep.subr.bf16.mxu0 %v1098
    %1179 = vmatpush1.bf16.msra.mxu0 %v1097
    %1180 = vmatprep.subr.bf16.mxu0 %v1094
    %1181 = vmatpush1.bf16.msra.mxu0 %v1093
    %1182 = vmatprep.subr.bf16.mxu0 %v1090
    %1183 = vmatpush1.bf16.msra.mxu0 %v1089
    %1184 = vmatprep.subr.bf16.mxu0 %v1086
    %1185 = vmatpush1.bf16.msra.mxu0 %v1085
    %1186 = vmatprep.subr.bf16.mxu0 %v1082
    %1187 = vmatpush1.bf16.msra.mxu0 %v1081
    %1188 = vmatprep.subr.bf16.mxu0 %v1078
    %1189 = vmatpush1.bf16.msra.mxu0 %v1077
    %1190 = vmatprep.subr.bf16.mxu0 %v1074
    %1191 = vmatpush1.bf16.msra.mxu0 %v1073
    %1192 = vmatprep.subr.bf16.mxu0 0
    %1193 = vmatpush2.bf16.msra.mxu0 0
    %1194 = vmatprep.subr.bf16.mxu0 0
    %1195 = vmatpush2.bf16.msra.mxu0 0
    %1196 = vmatprep.subr.bf16.mxu0 0
    %1197 = vmatpush2.bf16.msra.mxu0 0
    %1198 = vmatprep.subr.bf16.mxu0 0
    %1199 = vmatpush2.bf16.msra.mxu0 0
    %1200 = vmatprep.subr.bf16.mxu0 0
    %1201 = vmatpush2.bf16.msra.mxu0 0
    %1202 = vmatprep.subr.bf16.mxu0 0
    %1203 = vmatpush2.bf16.msra.mxu0 0
    %1204 = vmatprep.subr.bf16.mxu0 0
    %1205 = vmatpush2.bf16.msra.mxu0 0
    %1206 = vmatprep.subr.bf16.mxu0 0
    %1207 = vmatpush2.bf16.msra.mxu0 0
    %1208 = vmatprep.mubr.bf16.mxu0 0
    %1209 = vmatmul.mubr.bf16.gmra.mxu0 %v920
    %v1210 = vpop.f32.mrf.mxu0
    %v1211 = vadd.f32 %v966, %v1210
    %v1212 = vpop.f32.mrf.mxu0
    %v1213 = vadd.f32 %v970, %v1212
    %v1214 = vpop.f32.mrf.mxu0
    %v1215 = vpop.f32.mrf.mxu0
    %1216 = vdwg.mxu0
    %v1217 = vmax.f32 %v1170, 0.0
    %v1218 = vmax.f32 %v1172, 0.0
    %v1219 = vmax.f32 %v1211, 0.0
    %v1220 = vmax.f32 %v1213, 0.0
    %v1221 = vpack.c.bf16 %v1217, %v1217
    %v1222 = vpack.c.bf16 %v1218, %v1218
    %v1223 = vpack.c.bf16 %v1219, %v1219
    %v1224 = vpack.c.bf16 %v1220, %v1220
    %v1225 = vld [vmem:[#allocation13] sm:$0xf]
    %v1226 = vld [vmem:[#allocation13 + $0x4] sm:$0xf]
    %v1227 = vld [vmem:[#allocation13 + $0x8] sm:$0xf]
    %v1228 = vld [vmem:[#allocation13 + $0xc] sm:$0xf]
    %v1229 = vld [vmem:[#allocation13 + $0x10] sm:$0xf]
    %v1230 = vld [vmem:[#allocation13 + $0x14] sm:$0xf]
    %v1231 = vld [vmem:[#allocation13 + $0x18] sm:$0xf]
    %v1232 = vld [vmem:[#allocation13 + $0x1c] sm:$0xf]
    %v1233 = vld [vmem:[#allocation13 + $0x20] sm:$0xf]
    %v1234 = vld [vmem:[#allocation13 + $0x24] sm:$0xf]
    %v1235 = vld [vmem:[#allocation13 + $0x28] sm:$0xf]
    %v1236 = vld [vmem:[#allocation13 + $0x2c] sm:$0xf]
    %v1237 = vld [vmem:[#allocation13 + $0x30] sm:$0xf]
    %v1238 = vld [vmem:[#allocation13 + $0x34] sm:$0xf]
    %v1239 = vld [vmem:[#allocation13 + $0x38] sm:$0xf]
    %v1240 = vld [vmem:[#allocation13 + $0x3c] sm:$0xf]
    %v1241 = vld [vmem:[#allocation13 + $0x40] sm:$0xf]
    %v1242 = vld [vmem:[#allocation13 + $0x44] sm:$0xf]
    %v1243 = vld [vmem:[#allocation13 + $0x48] sm:$0xf]
    %v1244 = vld [vmem:[#allocation13 + $0x4c] sm:$0xf]
    %v1245 = vld [vmem:[#allocation13 + $0x50] sm:$0xf]
    %v1246 = vld [vmem:[#allocation13 + $0x54] sm:$0xf]
    %v1247 = vld [vmem:[#allocation13 + $0x58] sm:$0xf]
    %v1248 = vld [vmem:[#allocation13 + $0x5c] sm:$0xf]
    %v1249 = vld [vmem:[#allocation13 + $0x60] sm:$0xf]
    %v1250 = vld [vmem:[#allocation13 + $0x64] sm:$0xf]
    %v1251 = vld [vmem:[#allocation13 + $0x68] sm:$0xf]
    %v1252 = vld [vmem:[#allocation13 + $0x6c] sm:$0xf]
    %v1253 = vld [vmem:[#allocation13 + $0x70] sm:$0xf]
    %v1254 = vld [vmem:[#allocation13 + $0x74] sm:$0xf]
    %v1255 = vld [vmem:[#allocation13 + $0x78] sm:$0xf]
    %v1256 = vld [vmem:[#allocation13 + $0x7c] sm:$0xf]
    %v1257 = vld [vmem:[#allocation13 + $0x80] sm:$0xf]
    %v1258 = vld [vmem:[#allocation13 + $0x84] sm:$0xf]
    %v1259 = vld [vmem:[#allocation13 + $0x88] sm:$0xf]
    %v1260 = vld [vmem:[#allocation13 + $0x8c] sm:$0xf]
    %v1261 = vld [vmem:[#allocation13 + $0x90] sm:$0xf]
    %v1262 = vld [vmem:[#allocation13 + $0x94] sm:$0xf]
    %v1263 = vld [vmem:[#allocation13 + $0x98] sm:$0xf]
    %v1264 = vld [vmem:[#allocation13 + $0x9c] sm:$0xf]
    %v1265 = vld [vmem:[#allocation13 + $0xa0] sm:$0xf]
    %v1266 = vld [vmem:[#allocation13 + $0xa4] sm:$0xf]
    %v1267 = vld [vmem:[#allocation13 + $0xa8] sm:$0xf]
    %v1268 = vld [vmem:[#allocation13 + $0xac] sm:$0xf]
    %v1269 = vld [vmem:[#allocation13 + $0xb0] sm:$0xf]
    %v1270 = vld [vmem:[#allocation13 + $0xb4] sm:$0xf]
    %v1271 = vld [vmem:[#allocation13 + $0xb8] sm:$0xf]
    %v1272 = vld [vmem:[#allocation13 + $0xbc] sm:$0xf]
    %v1273 = vld [vmem:[#allocation13 + $0xc0] sm:$0xf]
    %v1274 = vld [vmem:[#allocation13 + $0xc4] sm:$0xf]
    %v1275 = vld [vmem:[#allocation13 + $0xc8] sm:$0xf]
    %v1276 = vld [vmem:[#allocation13 + $0xcc] sm:$0xf]
    %v1277 = vld [vmem:[#allocation13 + $0xd0] sm:$0xf]
    %v1278 = vld [vmem:[#allocation13 + $0xd4] sm:$0xf]
    %v1279 = vld [vmem:[#allocation13 + $0xd8] sm:$0xf]
    %v1280 = vld [vmem:[#allocation13 + $0xdc] sm:$0xf]
    %v1281 = vld [vmem:[#allocation13 + $0xe0] sm:$0xf]
    %v1282 = vld [vmem:[#allocation13 + $0xe4] sm:$0xf]
    %v1283 = vld [vmem:[#allocation13 + $0xe8] sm:$0xf]
    %v1284 = vld [vmem:[#allocation13 + $0xec] sm:$0xf]
    %v1285 = vld [vmem:[#allocation13 + $0xf0] sm:$0xf]
    %v1286 = vld [vmem:[#allocation13 + $0xf4] sm:$0xf]
    %v1287 = vld [vmem:[#allocation13 + $0xf8] sm:$0xf]
    %v1288 = vld [vmem:[#allocation13 + $0xfc] sm:$0xf]
    %v1289 = vld [vmem:[%s9] sm:$0x1]
    %v1291 = vlaneseq
    %v1292 = vshrl.u32 %v1291, 7
    %v1293 = vsub.s32 0, %v1292
    %v1294 = vrot.slane %v1289, %v1293
    %v1360 = vunpack.c.l.b16 %v1225
    %v1361 = vunpack.c.l.b16 %v1226
    %v1362 = vunpack.c.l.b16 %v1227
    %v1363 = vunpack.c.l.b16 %v1228
    %v1364 = vunpack.c.l.b16 %v1229
    %v1365 = vunpack.c.l.b16 %v1230
    %v1366 = vunpack.c.l.b16 %v1231
    %v1367 = vunpack.c.l.b16 %v1232
    %v1368 = vunpack.c.l.b16 %v1233
    %v1369 = vunpack.c.l.b16 %v1234
    %v1370 = vunpack.c.l.b16 %v1235
    %v1371 = vunpack.c.l.b16 %v1236
    %v1372 = vunpack.c.l.b16 %v1237
    %v1373 = vunpack.c.l.b16 %v1238
    %v1374 = vunpack.c.l.b16 %v1239
    %v1375 = vunpack.c.l.b16 %v1240
    %v1376 = vunpack.c.l.b16 %v1241
    %v1377 = vunpack.c.l.b16 %v1242
    %v1378 = vunpack.c.l.b16 %v1243
    %v1379 = vunpack.c.l.b16 %v1244
    %v1380 = vunpack.c.l.b16 %v1245
    %v1381 = vunpack.c.l.b16 %v1246
    %v1382 = vunpack.c.l.b16 %v1247
    %v1383 = vunpack.c.l.b16 %v1248
    %v1384 = vunpack.c.l.b16 %v1249
    %v1385 = vunpack.c.l.b16 %v1250
    %v1386 = vunpack.c.l.b16 %v1251
    %v1387 = vunpack.c.l.b16 %v1252
    %v1388 = vunpack.c.l.b16 %v1253
    %v1389 = vunpack.c.l.b16 %v1254
    %v1390 = vunpack.c.l.b16 %v1255
    %v1391 = vunpack.c.l.b16 %v1256
    %v1392 = vunpack.c.l.b16 %v1257
    %v1393 = vunpack.c.l.b16 %v1258
    %v1394 = vunpack.c.l.b16 %v1259
    %v1395 = vunpack.c.l.b16 %v1260
    %v1396 = vunpack.c.l.b16 %v1261
    %v1397 = vunpack.c.l.b16 %v1262
    %v1398 = vunpack.c.l.b16 %v1263
    %v1399 = vunpack.c.l.b16 %v1264
    %v1400 = vunpack.c.l.b16 %v1265
    %v1401 = vunpack.c.l.b16 %v1266
    %v1402 = vunpack.c.l.b16 %v1267
    %v1403 = vunpack.c.l.b16 %v1268
    %v1404 = vunpack.c.l.b16 %v1269
    %v1405 = vunpack.c.l.b16 %v1270
    %v1406 = vunpack.c.l.b16 %v1271
    %v1407 = vunpack.c.l.b16 %v1272
    %v1408 = vunpack.c.l.b16 %v1273
    %v1409 = vunpack.c.l.b16 %v1274
    %v1410 = vunpack.c.l.b16 %v1275
    %v1411 = vunpack.c.l.b16 %v1276
    %v1412 = vunpack.c.l.b16 %v1277
    %v1413 = vunpack.c.l.b16 %v1278
    %v1414 = vunpack.c.l.b16 %v1279
    %v1415 = vunpack.c.l.b16 %v1280
    %v1416 = vunpack.c.l.b16 %v1281
    %v1417 = vunpack.c.l.b16 %v1282
    %v1418 = vunpack.c.l.b16 %v1283
    %v1419 = vunpack.c.l.b16 %v1284
    %v1420 = vunpack.c.l.b16 %v1285
    %v1421 = vunpack.c.l.b16 %v1286
    %v1422 = vunpack.c.l.b16 %v1287
    %v1423 = vunpack.c.l.b16 %v1288
    %v1424 = vpack.c.b16 %v1361, %v1360
    %v1425 = vpack.c.b16 %v1363, %v1362
    %v1426 = vpack.c.b16 %v1365, %v1364
    %v1427 = vpack.c.b16 %v1367, %v1366
    %v1428 = vpack.c.b16 %v1369, %v1368
    %v1429 = vpack.c.b16 %v1371, %v1370
    %v1430 = vpack.c.b16 %v1373, %v1372
    %v1431 = vpack.c.b16 %v1375, %v1374
    %v1432 = vpack.c.b16 %v1377, %v1376
    %v1433 = vpack.c.b16 %v1379, %v1378
    %v1434 = vpack.c.b16 %v1381, %v1380
    %v1435 = vpack.c.b16 %v1383, %v1382
    %v1436 = vpack.c.b16 %v1385, %v1384
    %v1437 = vpack.c.b16 %v1387, %v1386
    %v1438 = vpack.c.b16 %v1389, %v1388
    %v1439 = vpack.c.b16 %v1391, %v1390
    %v1440 = vpack.c.b16 %v1393, %v1392
    %v1441 = vpack.c.b16 %v1395, %v1394
    %v1442 = vpack.c.b16 %v1397, %v1396
    %v1443 = vpack.c.b16 %v1399, %v1398
    %v1444 = vpack.c.b16 %v1401, %v1400
    %v1445 = vpack.c.b16 %v1403, %v1402
    %v1446 = vpack.c.b16 %v1405, %v1404
    %v1447 = vpack.c.b16 %v1407, %v1406
    %v1448 = vpack.c.b16 %v1409, %v1408
    %v1449 = vpack.c.b16 %v1411, %v1410
    %v1450 = vpack.c.b16 %v1413, %v1412
    %v1451 = vpack.c.b16 %v1415, %v1414
    %v1452 = vpack.c.b16 %v1417, %v1416
    %v1453 = vpack.c.b16 %v1419, %v1418
    %v1454 = vpack.c.b16 %v1421, %v1420
    %v1455 = vpack.c.b16 %v1423, %v1422
    %1488 = vmatprep.subr.bf16.mxu0 0
    %1489 = vmatpush1.bf16.msra.mxu0 %v1431
    %1490 = vmatprep.subr.bf16.mxu0 0
    %1491 = vmatpush1.bf16.msra.mxu0 %v1430
    %1492 = vmatprep.subr.bf16.mxu0 0
    %1493 = vmatpush1.bf16.msra.mxu0 %v1429
    %1494 = vmatprep.subr.bf16.mxu0 0
    %1495 = vmatpush1.bf16.msra.mxu0 %v1428
    %1496 = vmatprep.subr.bf16.mxu0 0
    %1497 = vmatpush1.bf16.msra.mxu0 %v1427
    %1498 = vmatprep.subr.bf16.mxu0 0
    %1499 = vmatpush1.bf16.msra.mxu0 %v1426
    %1500 = vmatprep.subr.bf16.mxu0 0
    %1501 = vmatpush1.bf16.msra.mxu0 %v1425
    %1502 = vmatprep.subr.bf16.mxu0 0
    %1503 = vmatpush1.bf16.msra.mxu0 %v1424
    %1504 = vmatprep.subr.bf16.mxu0 0
    %1505 = vmatpush2.bf16.msra.mxu0 %v1439
    %1506 = vmatprep.subr.bf16.mxu0 0
    %1507 = vmatpush2.bf16.msra.mxu0 %v1438
    %1508 = vmatprep.subr.bf16.mxu0 0
    %1509 = vmatpush2.bf16.msra.mxu0 %v1437
    %1510 = vmatprep.subr.bf16.mxu0 0
    %1511 = vmatpush2.bf16.msra.mxu0 %v1436
    %1512 = vmatprep.subr.bf16.mxu0 0
    %1513 = vmatpush2.bf16.msra.mxu0 %v1435
    %1514 = vmatprep.subr.bf16.mxu0 0
    %1515 = vmatpush2.bf16.msra.mxu0 %v1434
    %1516 = vmatprep.subr.bf16.mxu0 0
    %1517 = vmatpush2.bf16.msra.mxu0 %v1433
    %1518 = vmatprep.subr.bf16.mxu0 0
    %1519 = vmatpush2.bf16.msra.mxu0 %v1432
    %1520 = vmatprep.mubr.bf16.mxu0 %v1222
    %1521 = vmatmul.mubr.bf16.gmra.mxu0 %v1221
    %v1522 = vpop.f32.mrf.mxu0
    %v1523 = vadd.f32 %v1294, %v1522
    %v1524 = vpop.f32.mrf.mxu0
    %v1525 = vpop.f32.mrf.mxu0
    %v1526 = vpop.f32.mrf.mxu0
    %1527 = vdwg.mxu0
    %1528 = vmatprep.subr.bf16.mxu0 0
    %1529 = vmatpush1.bf16.msra.mxu0 %v1447
    %1530 = vmatprep.subr.bf16.mxu0 0
    %1531 = vmatpush1.bf16.msra.mxu0 %v1446
    %1532 = vmatprep.subr.bf16.mxu0 0
    %1533 = vmatpush1.bf16.msra.mxu0 %v1445
    %1534 = vmatprep.subr.bf16.mxu0 0
    %1535 = vmatpush1.bf16.msra.mxu0 %v1444
    %1536 = vmatprep.subr.bf16.mxu0 0
    %1537 = vmatpush1.bf16.msra.mxu0 %v1443
    %1538 = vmatprep.subr.bf16.mxu0 0
    %1539 = vmatpush1.bf16.msra.mxu0 %v1442
    %1540 = vmatprep.subr.bf16.mxu0 0
    %1541 = vmatpush1.bf16.msra.mxu0 %v1441
    %1542 = vmatprep.subr.bf16.mxu0 0
    %1543 = vmatpush1.bf16.msra.mxu0 %v1440
    %1544 = vmatprep.subr.bf16.mxu0 0
    %1545 = vmatpush2.bf16.msra.mxu0 %v1455
    %1546 = vmatprep.subr.bf16.mxu0 0
    %1547 = vmatpush2.bf16.msra.mxu0 %v1454
    %1548 = vmatprep.subr.bf16.mxu0 0
    %1549 = vmatpush2.bf16.msra.mxu0 %v1453
    %1550 = vmatprep.subr.bf16.mxu0 0
    %1551 = vmatpush2.bf16.msra.mxu0 %v1452
    %1552 = vmatprep.subr.bf16.mxu0 0
    %1553 = vmatpush2.bf16.msra.mxu0 %v1451
    %1554 = vmatprep.subr.bf16.mxu0 0
    %1555 = vmatpush2.bf16.msra.mxu0 %v1450
    %1556 = vmatprep.subr.bf16.mxu0 0
    %1557 = vmatpush2.bf16.msra.mxu0 %v1449
    %1558 = vmatprep.subr.bf16.mxu0 0
    %1559 = vmatpush2.bf16.msra.mxu0 %v1448
    %1560 = vmatprep.mubr.bf16.mxu0 %v1224
    %1561 = vmatmul.mubr.bf16.gmra.mxu0 %v1223
    %v1562 = vpop.f32.mrf.mxu0
    %v1563 = vadd.f32 %v1523, %v1562
    %v1564 = vpop.f32.mrf.mxu0
    %v1565 = vpop.f32.mrf.mxu0
    %v1566 = vpop.f32.mrf.mxu0
    %1567 = vdwg.mxu0
    %v1568 = vxor.u32 %v1563, 2147483648
    %v1569 = vmul.f32 %v1568, 1.442695
    %v1570 = vpow.pop %v1569
    %v1571 = vadd.f32 %v1570, 1.0
    %v1572 = vrcp.pop %v1571
    %v1573 = vmul.f32 1.0, %v1572
    %1574 = vst [vmem:[#allocation14] sm:$0xff] %v1573
    %1575 = vst [vmem:[#allocation15] sm:$0xff] %v919
    %1576 = vst [vmem:[#allocation17] sm:$0xff] %v908
    %1577 = vst [vmem:[#allocation17 + $0x8] sm:$0xff] %v910
    // Predicated region
    $region70: #{tpu_custom_call.1} parent=1 // pred_check
      _
    $region71: #{tpu_custom_call.1} parent=1 // pred_check_branch
      %1579 = sbr.rel (0) target = $region73
    $region72: #{tpu_custom_call.1} parent=1 // pred_region
      %s1581 = ssub.s32 128, 128
      %1582 = vsyncadd [#allocation4], %s1581
      %s1584 = sshll.u32 [#allocation14], 4
      %s1585 = int_to_ptr.vmem [resolvable:$true] %s1584
      %1587 = dma.vmem_to_hbm [thread:$0]  %s1585, 128, %s10, [#allocation4]
    $region73: #{tpu_custom_call.1} parent=1 // pred_fallthru
      _
    // Predicated region
    $region74: #{tpu_custom_call.1} parent=1 // pred_check
      _
    $region75: #{tpu_custom_call.1} parent=1 // pred_check_branch
      %1589 = sbr.rel (0) target = $region77
    $region76: #{tpu_custom_call.1} parent=1 // pred_region
      %s1591 = ssub.s32 128, 128
      %1592 = vsyncadd [#allocation16], %s1591
      %s1594 = sshll.u32 [#allocation15], 4
      %s1595 = int_to_ptr.vmem [resolvable:$true] %s1594
      %1597 = dma.vmem_to_hbm [thread:$0]  %s1595, 128, %s11, [#allocation16]
    $region77: #{tpu_custom_call.1} parent=1 // pred_fallthru
      _
    // Predicated region
    $region78: #{tpu_custom_call.1} parent=1 // pred_check
      _
    $region79: #{tpu_custom_call.1} parent=1 // pred_check_branch
      %1599 = sbr.rel (0) target = $region81
    $region80: #{tpu_custom_call.1} parent=1 // pred_region
      %s1601 = ssub.s32 256, 256
      %1602 = vsyncadd [#allocation16], %s1601
      %s1604 = sshll.u32 [#allocation17], 4
      %s1605 = int_to_ptr.vmem [resolvable:$true] %s1604
      %1607 = dma.vmem_to_hbm [thread:$0]  %s1605, 256, %s12, [#allocation16]
    $region81: #{tpu_custom_call.1} parent=1 // pred_fallthru
      _
    // Predicated region
    $region82: #{tpu_custom_call.1} parent=1 // pred_check
      _
    $region83: #{tpu_custom_call.1} parent=1 // pred_check_branch
      %1609 = sbr.rel (0) target = $region85
    $region84: #{tpu_custom_call.1} parent=1 // pred_region
      %1610 = dma.done [#allocation4], 128
    $region85: #{tpu_custom_call.1} parent=1 // pred_fallthru
      _
    // Predicated region
    $region86: #{tpu_custom_call.1} parent=1 // pred_check
      _
    $region87: #{tpu_custom_call.1} parent=1 // pred_check_branch
      %1612 = sbr.rel (0) target = $region89
    $region88: #{tpu_custom_call.1} parent=1 // pred_region
      %1613 = dma.done [#allocation16], 128
    $region89: #{tpu_custom_call.1} parent=1 // pred_fallthru
      _
    // Predicated region
    $region90: #{tpu_custom_call.1} parent=1 // pred_check
      _
    $region91: #{tpu_custom_call.1} parent=1 // pred_check_branch
      %1615 = sbr.rel (0) target = $region93
    $region92: #{tpu_custom_call.1} parent=1 // pred_region
      %1616 = dma.done [#allocation16], 256
    $region93: #{tpu_custom_call.1} parent=1 // pred_fallthru
      _
    %1617 = vsyncpa [#allocation3], 1
    %1618 = vsyncpa [#allocation6], 1
    %1619 = vsyncpa [#allocation9], 1
    %1620 = vsyncpa [#allocation12], 1
    %1621 = vsyncpa [#allocation4], 1
    %1622 = vsyncpa [#allocation16], 1

</llo_original>
